<compile_context>
chip_gen: v7x
topology: tpu7x:2x2x1
jax: 0.10.0
libtpu: 0.0.40
codegen_flags: <defaults>
</compile_context>

<pallas_src>
import functools
import math

import jax
import jax.numpy as jnp
from jax import lax
from jax.experimental import pallas as pl
from jax.experimental.pallas import tpu as pltpu


def _layernorm(x, gamma, beta, eps=1e-6):
    # x: (TQ, D) f32; gamma, beta: (1, D) f32
    mean = jnp.mean(x, axis=-1, keepdims=True)
    c = x - mean
    var = jnp.mean(c * c, axis=-1, keepdims=True)
    return c * lax.rsqrt(var + eps) * gamma + beta


def encoder_layer_kernel(
    xq_ref, xkv_ref, mask_ref,
    wq_ref, bq_ref, wk_ref, bk_ref, wv_ref, bv_ref,
    wo_ref, bo_ref,
    g1_ref, be1_ref,
    w1_ref, b1_ref, w2_ref, b2_ref,
    g2_ref, be2_ref,
    out_ref, attnw_ref,
    k_sc, v_sc,
    *, n_heads, d_k,
):
    qi = pl.program_id(1)

    # --- K/V head projections: once per batch, cached in bf16 VMEM scratch ---
    @pl.when(qi == 0)
    def _():
        xkv = xkv_ref[0].astype(jnp.bfloat16)                      # (S, D)
        for h in range(n_heads):
            kh = jnp.dot(xkv, wk_ref[h],
                         preferred_element_type=jnp.float32) + bk_ref[h]
            vh = jnp.dot(xkv, wv_ref[h],
                         preferred_element_type=jnp.float32) + bv_ref[h]
            k_sc[h] = kh.astype(jnp.bfloat16)                      # (S, d_k)
            v_sc[h] = vh.astype(jnp.bfloat16)

    xq_f32 = xq_ref[0]                                             # (TQ, D) f32
    xq = xq_f32.astype(jnp.bfloat16)
    masked = mask_ref[0] > 0                                       # (TQ, S), once

    tq, d_model = out_ref.shape[1], out_ref.shape[2]
    inv_sqrt_dk = 1.0 / math.sqrt(d_k)

    attn_acc = jnp.zeros((tq, d_model), jnp.float32)
    for h in range(n_heads):
        # Q projection for this q-tile; fold 1/sqrt(d_k) into q (O(TQ*d_k)).
        qh = jnp.dot(xq, wq_ref[h],
                     preferred_element_type=jnp.float32) + bq_ref[h]
        qh = (qh * inv_sqrt_dk).astype(jnp.bfloat16)               # (TQ, d_k)

        # scores = q . k^T without materializing k^T (contract last dims).
        scores = lax.dot_general(
            qh, k_sc[h], (((1,), (1,)), ((), ())),
            preferred_element_type=jnp.float32)                    # (TQ, S)
        scores = jnp.where(masked, jnp.float32(-1e9), scores)
        scores = scores - jnp.max(scores, axis=-1, keepdims=True)
        e = jnp.exp(scores)
        w = e * pl.reciprocal(jnp.sum(e, axis=-1, keepdims=True), approx=True)
        attnw_ref[0, h] = w                                        # lane-dense slab

        ctx = jnp.dot(w.astype(jnp.bfloat16), v_sc[h],
                      preferred_element_type=jnp.float32)          # (TQ, d_k)
        # accumulate output projection per head (no concat of heads)
        attn_acc = attn_acc + jnp.dot(ctx.astype(jnp.bfloat16), wo_ref[h],
                                      preferred_element_type=jnp.float32)

    attn_out = attn_acc + bo_ref[...]
    # dropout1: identity (eval mode)
    y = _layernorm(xq_f32 + attn_out, g1_ref[...], be1_ref[...])   # (TQ, D) f32

    # --- position-wise FFN (bf16 MXU, f32 accumulate) ---
    h1 = jnp.maximum(
        jnp.dot(y.astype(jnp.bfloat16), w1_ref[...],
                preferred_element_type=jnp.float32) + b1_ref[...], 0.0)
    ffn = jnp.dot(h1.astype(jnp.bfloat16), w2_ref[...],
                  preferred_element_type=jnp.float32) + b2_ref[...]
    # dropout2: identity (eval mode)
    out_ref[0] = _layernorm(y + ffn, g2_ref[...], be2_ref[...])


def make_params(key, d_model, n_heads, d_ff):
    d_proj = d_model // 4
    d_k = d_model // n_heads // 4
    ks = jax.random.split(key, 12)
    scale = 0.02
    bf16 = jnp.bfloat16
    params = dict(
        # large weights stored bf16 (MXU operands + half the DMA/VMEM)
        wq=(scale * jax.random.normal(ks[0], (d_model, d_proj))).astype(bf16),
        wk=(scale * jax.random.normal(ks[1], (d_model, d_proj))).astype(bf16),
        wv=(scale * jax.random.normal(ks[2], (d_model, d_proj))).astype(bf16),
        wo=(scale * jax.random.normal(ks[3], (n_heads * d_k, d_model))).astype(bf16),
        w1=(scale * jax.random.normal(ks[4], (d_model, d_ff))).astype(bf16),
        w2=(scale * jax.random.normal(ks[5], (d_ff, d_model))).astype(bf16),
        # biases / LN params stay f32
        bq=0.01 * jax.random.normal(ks[6], (d_proj,), jnp.float32),
        bk=0.01 * jax.random.normal(ks[7], (d_proj,), jnp.float32),
        bv=0.01 * jax.random.normal(ks[8], (d_proj,), jnp.float32),
        bo=0.01 * jax.random.normal(ks[9], (d_model,), jnp.float32),
        b1=0.01 * jax.random.normal(ks[10], (d_ff,), jnp.float32),
        b2=0.01 * jax.random.normal(ks[11], (d_model,), jnp.float32),
        g1=jnp.ones((d_model,), jnp.float32) * 1.1,
        be1=jnp.ones((d_model,), jnp.float32) * 0.05,
        g2=jnp.ones((d_model,), jnp.float32) * 0.9,
        be2=jnp.ones((d_model,), jnp.float32) * -0.05,
    )
    return params, d_k


def _pick_tq(S):
    if S <= 128:
        return S
    for tq in (128, 64, 32, 16, 8):
        if S % tq == 0:
            return tq
    return S


def encoder_layer(x, attn_mask, params, n_heads, d_k):
    B, S, D = x.shape
    d_proj = n_heads * d_k
    d_ff = params["w1"].shape[1]
    TQ = _pick_tq(S)
    n_q = S // TQ

    # Per-head weight layouts: heads on the leading (non-lane) axis.
    wq_h = params["wq"].reshape(D, n_heads, d_k).transpose(1, 0, 2)
    wk_h = params["wk"].reshape(D, n_heads, d_k).transpose(1, 0, 2)
    wv_h = params["wv"].reshape(D, n_heads, d_k).transpose(1, 0, 2)
    wo_h = params["wo"].reshape(n_heads, d_k, D)
    bq_h = params["bq"].reshape(n_heads, 1, d_k)
    bk_h = params["bk"].reshape(n_heads, 1, d_k)
    bv_h = params["bv"].reshape(n_heads, 1, d_k)
    bo = params["bo"].reshape(1, D)
    g1, be1 = params["g1"].reshape(1, D), params["be1"].reshape(1, D)
    g2, be2 = params["g2"].reshape(1, D), params["be2"].reshape(1, D)
    b1 = params["b1"].reshape(1, d_ff)
    b2 = params["b2"].reshape(1, D)
    w1, w2 = params["w1"], params["w2"]

    # bf16 0/1 mask: 4x less DMA than int32, same masked_fill(-1e9) semantics.
    mask_bf16 = attn_mask.astype(jnp.bfloat16)

    def const(shape):
        zeros = (0,) * len(shape)
        return pl.BlockSpec(shape, lambda b, qi, _z=zeros: _z)

    in_specs = [
        pl.BlockSpec((1, TQ, D), lambda b, qi: (b, qi, 0)),   # x (query tile)
        pl.BlockSpec((1, S, D), lambda b, qi: (b, 0, 0)),     # x (keys/values)
        pl.BlockSpec((1, TQ, S), lambda b, qi: (b, qi, 0)),   # mask rows
        const((n_heads, D, d_k)), const((n_heads, 1, d_k)),   # WQ, bq
        const((n_heads, D, d_k)), const((n_heads, 1, d_k)),   # WK, bk
        const((n_heads, D, d_k)), const((n_heads, 1, d_k)),   # WV, bv
        const((n_heads, d_k, D)), const((1, D)),              # WO, bo
        const((1, D)), const((1, D)),                         # LN1 gamma, beta
        const((D, d_ff)), const((1, d_ff)),                   # FFN linear1
        const((d_ff, D)), const((1, D)),                      # FFN linear2
        const((1, D)), const((1, D)),                         # LN2 gamma, beta
    ]
    out_specs = (
        pl.BlockSpec((1, TQ, D), lambda b, qi: (b, qi, 0)),
        pl.BlockSpec((1, n_heads, TQ, S), lambda b, qi: (b, 0, qi, 0)),
    )
    out_shape = (
        jax.ShapeDtypeStruct((B, S, D), jnp.float32),
        jax.ShapeDtypeStruct((B, n_heads, S, S), jnp.float32),
    )
    scratch_shapes = [
        pltpu.VMEM((n_heads, S, d_k), jnp.bfloat16),   # K heads cache
        pltpu.VMEM((n_heads, S, d_k), jnp.bfloat16),   # V heads cache
    ]

    flops = B * (6 * S * D * d_proj + 4 * n_heads * S * S * d_k
                 + 2 * S * d_proj * D + 4 * S * D * d_ff)
    bytes_accessed = (2 * B * S * D * 4           # x read (q + kv) + out write
                      + B * S * D * 4
                      + B * S * S * 2             # bf16 mask
                      + B * n_heads * S * S * 4   # attn weights writeback
                      + 2 * (4 * D * d_proj + 2 * D * d_ff))   # bf16 weights
    cost = pl.CostEstimate(flops=int(flops),
                           transcendentals=int(B * n_heads * S * S),
                           bytes_accessed=int(bytes_accessed))

    kernel = functools.partial(encoder_layer_kernel, n_heads=n_heads, d_k=d_k)

    return pl.pallas_call(
        kernel,
        grid=(B, n_q),
        in_specs=in_specs,
        out_specs=out_specs,
        out_shape=out_shape,
        scratch_shapes=scratch_shapes,
        compiler_params=pltpu.CompilerParams(
            # batch axis is independent -> shardable across v7x TensorCores;
            # q-tile axis carries the K/V scratch -> must remain sequential.
            dimension_semantics=("parallel", "arbitrary"),
            vmem_limit_bytes=64 * 1024 * 1024,
        ),
        cost_estimate=cost,
    )(
        x, x, mask_bf16,
        wq_h, bq_h, wk_h, bk_h, wv_h, bv_h,
        wo_h, bo,
        g1, be1, w1, b1, w2, b2, g2, be2,
    )


def encoder_layer_ref(x, attn_mask, params, n_heads, d_k):
    """Pure-JAX f32 reference replicating the PyTorch forward (eval mode)."""
    B, S, D = x.shape
    f32 = lambda a: a.astype(jnp.float32)
    q = x @ f32(params["wq"]) + params["bq"]
    k = x @ f32(params["wk"]) + params["bk"]
    v = x @ f32(params["wv"]) + params["bv"]

    def split_heads(t):
        return t.reshape(B, S, n_heads, d_k).transpose(0, 2, 1, 3)

    qh, kh, vh = split_heads(q), split_heads(k), split_heads(v)
    scores = jnp.einsum("bhsd,bhtd->bhst", qh, kh) / math.sqrt(d_k)
    scores = jnp.where(attn_mask[:, None, :, :], -1e9, scores)
    w = jax.nn.softmax(scores, axis=-1)
    attn = jnp.einsum("bhst,bhtd->bhsd", w, vh).transpose(0, 2, 1, 3).reshape(B, S, -1)
    attn_out = attn @ f32(params["wo"]) + params["bo"]

    def ln(t, g, b):
        m = t.mean(-1, keepdims=True)
        var = ((t - m) ** 2).mean(-1, keepdims=True)
        return (t - m) / jnp.sqrt(var + 1e-6) * g + b

    y = ln(x + attn_out, params["g1"], params["be1"])
    h1 = jnp.maximum(y @ f32(params["w1"]) + params["b1"], 0.0)
    f = h1 @ f32(params["w2"]) + params["b2"]
    return ln(y + f, params["g2"], params["be2"]), w


if __name__ == "__main__":
    B, S = 2, 8
    d_model, n_heads, d_ff = 32, 2, 64
    p_drop = 0.1  # inactive (eval mode)

    key = jax.random.PRNGKey(0)
    kx, kp = jax.random.split(key, 2)

    x = jax.random.normal(kx, (B, S, d_model), jnp.float32)
    # padding-style attention mask: mask the last 2 key positions of batch 1
    attn_mask = jnp.zeros((B, S, S), dtype=bool)
    attn_mask = attn_mask.at[1, :, S - 2:].set(True)

    params, d_k = make_params(kp, d_model, n_heads, d_ff)

    out, attn_w = encoder_layer(x, attn_mask, params, n_heads, d_k)
    out = jax.block_until_ready(out)
    attn_w = jax.block_until_ready(attn_w)

    out_ref, attn_w_ref = encoder_layer_ref(x, attn_mask, params, n_heads, d_k)
    # bf16 MXU matmuls + approx EUP reciprocal -> compare with loosened tolerance
    assert jnp.allclose(out, out_ref, atol=3e-2, rtol=3e-2), "output mismatch"
    assert jnp.allclose(attn_w, attn_w_ref, atol=2e-2, rtol=2e-2), "attn mismatch"

    print("KERNEL_OK")
</pallas_src>

<mosaic_0001>
module attributes {stable_mosaic.version = 11 : i64} {
  func.func @encoder_layer_kernel(%arg0: i32, %arg1: i32, %arg2: memref<1x8x32xf32, #tpu.memory_space<vmem>>, %arg3: memref<1x8x32xf32, #tpu.memory_space<vmem>>, %arg4: memref<1x8x8xbf16, #tpu.memory_space<vmem>>, %arg5: memref<2x32x4xbf16, #tpu.memory_space<vmem>>, %arg6: memref<2x1x4xf32, #tpu.memory_space<vmem>>, %arg7: memref<2x32x4xbf16, #tpu.memory_space<vmem>>, %arg8: memref<2x1x4xf32, #tpu.memory_space<vmem>>, %arg9: memref<2x32x4xbf16, #tpu.memory_space<vmem>>, %arg10: memref<2x1x4xf32, #tpu.memory_space<vmem>>, %arg11: memref<2x4x32xbf16, #tpu.memory_space<vmem>>, %arg12: memref<1x32xf32, #tpu.memory_space<vmem>>, %arg13: memref<1x32xf32, #tpu.memory_space<vmem>>, %arg14: memref<1x32xf32, #tpu.memory_space<vmem>>, %arg15: memref<32x64xbf16, #tpu.memory_space<vmem>>, %arg16: memref<1x64xf32, #tpu.memory_space<vmem>>, %arg17: memref<64x32xbf16, #tpu.memory_space<vmem>>, %arg18: memref<1x32xf32, #tpu.memory_space<vmem>>, %arg19: memref<1x32xf32, #tpu.memory_space<vmem>>, %arg20: memref<1x32xf32, #tpu.memory_space<vmem>>, %arg21: memref<1x8x32xf32, #tpu.memory_space<vmem>>, %arg22: memref<1x2x8x8xf32, #tpu.memory_space<vmem>>, %arg23: memref<2x8x4xbf16, #tpu.memory_space<vmem>>, %arg24: memref<2x8x4xbf16, #tpu.memory_space<vmem>>) attributes {dimension_semantics = [#tpu.dimension_semantics<parallel>, #tpu.dimension_semantics<arbitrary>], iteration_bounds = array<i64: 2, 1>, scalar_prefetch = 0 : i64, scratch_operands = 2 : i64, tpu.core_type = #tpu.core_type<tc>, window_params = [{transform_indices = @transform_0, window_bounds = array<i64: 1, 8, 32>}, {transform_indices = @transform_1, window_bounds = array<i64: 1, 8, 32>}, {transform_indices = @transform_2, window_bounds = array<i64: 1, 8, 8>}, {pipeline_mode = #tpu.pipeline_mode<synchronous>, transform_indices = @transform_3, window_bounds = array<i64: 2, 32, 4>}, {pipeline_mode = #tpu.pipeline_mode<synchronous>, transform_indices = @transform_4, window_bounds = array<i64: 2, 1, 4>}, {pipeline_mode = #tpu.pipeline_mode<synchronous>, transform_indices = @transform_5, window_bounds = array<i64: 2, 32, 4>}, {pipeline_mode = #tpu.pipeline_mode<synchronous>, transform_indices = @transform_6, window_bounds = array<i64: 2, 1, 4>}, {pipeline_mode = #tpu.pipeline_mode<synchronous>, transform_indices = @transform_7, window_bounds = array<i64: 2, 32, 4>}, {pipeline_mode = #tpu.pipeline_mode<synchronous>, transform_indices = @transform_8, window_bounds = array<i64: 2, 1, 4>}, {pipeline_mode = #tpu.pipeline_mode<synchronous>, transform_indices = @transform_9, window_bounds = array<i64: 2, 4, 32>}, {pipeline_mode = #tpu.pipeline_mode<synchronous>, transform_indices = @transform_10, window_bounds = array<i64: 1, 32>}, {pipeline_mode = #tpu.pipeline_mode<synchronous>, transform_indices = @transform_11, window_bounds = array<i64: 1, 32>}, {pipeline_mode = #tpu.pipeline_mode<synchronous>, transform_indices = @transform_12, window_bounds = array<i64: 1, 32>}, {pipeline_mode = #tpu.pipeline_mode<synchronous>, transform_indices = @transform_13, window_bounds = array<i64: 32, 64>}, {pipeline_mode = #tpu.pipeline_mode<synchronous>, transform_indices = @transform_14, window_bounds = array<i64: 1, 64>}, {pipeline_mode = #tpu.pipeline_mode<synchronous>, transform_indices = @transform_15, window_bounds = array<i64: 64, 32>}, {pipeline_mode = #tpu.pipeline_mode<synchronous>, transform_indices = @transform_16, window_bounds = array<i64: 1, 32>}, {pipeline_mode = #tpu.pipeline_mode<synchronous>, transform_indices = @transform_17, window_bounds = array<i64: 1, 32>}, {pipeline_mode = #tpu.pipeline_mode<synchronous>, transform_indices = @transform_18, window_bounds = array<i64: 1, 32>}, {transform_indices = @transform_19, window_bounds = array<i64: 1, 8, 32>}, {transform_indices = @transform_20, window_bounds = array<i64: 1, 2, 8, 8>}]} {
    %c0_i32 = arith.constant 0 : i32
    %0 = arith.cmpi eq, %arg1, %c0_i32 : i32
    %1 = arith.extui %0 : i1 to i32
    %c0_i32_0 = arith.constant 0 : i32
    %2 = arith.cmpi ne, %1, %c0_i32_0 : i32
    scf.if %2 {
      %c0_94 = arith.constant 0 : index
      %c0_95 = arith.constant 0 : index
      %c0_96 = arith.constant 0 : index
      %151 = vector.load %arg3[%c0_94, %c0_95, %c0_96] : memref<1x8x32xf32, #tpu.memory_space<vmem>>, vector<1x8x32xf32>
      %152 = vector.shape_cast %151 : vector<1x8x32xf32> to vector<8x32xf32>
      %153 = arith.truncf %152 : vector<8x32xf32> to vector<8x32xbf16>
      %c0_97 = arith.constant 0 : index
      %c0_98 = arith.constant 0 : index
      %c0_99 = arith.constant 0 : index
      %154 = vector.load %arg7[%c0_97, %c0_98, %c0_99] : memref<2x32x4xbf16, #tpu.memory_space<vmem>>, vector<1x32x4xbf16>
      %155 = vector.shape_cast %154 : vector<1x32x4xbf16> to vector<32x4xbf16>
      %cst_100 = arith.constant dense<0.000000e+00> : vector<8x4xf32>
      %156 = tpu.matmul %153, %155, %cst_100 {dimension_numbers = #tpu.dot_dimension_numbers<[1], [0], [0], [1], [0, 0, 1, 1], [], []>} : vector<8x32xbf16>, vector<32x4xbf16>, vector<8x4xf32> -> vector<8x4xf32>
      %c0_101 = arith.constant 0 : index
      %c0_102 = arith.constant 0 : index
      %c0_103 = arith.constant 0 : index
      %157 = vector.load %arg8[%c0_101, %c0_102, %c0_103] : memref<2x1x4xf32, #tpu.memory_space<vmem>>, vector<1x1x4xf32>
      %158 = vector.shape_cast %157 : vector<1x1x4xf32> to vector<1x4xf32>
      %159 = vector.broadcast %158 : vector<1x4xf32> to vector<8x4xf32>
      %160 = arith.addf %156, %159 : vector<8x4xf32>
      %c0_104 = arith.constant 0 : index
      %c0_105 = arith.constant 0 : index
      %c0_106 = arith.constant 0 : index
      %161 = vector.load %arg9[%c0_104, %c0_105, %c0_106] : memref<2x32x4xbf16, #tpu.memory_space<vmem>>, vector<1x32x4xbf16>
      %162 = vector.shape_cast %161 : vector<1x32x4xbf16> to vector<32x4xbf16>
      %cst_107 = arith.constant dense<0.000000e+00> : vector<8x4xf32>
      %163 = tpu.matmul %153, %162, %cst_107 {dimension_numbers = #tpu.dot_dimension_numbers<[1], [0], [0], [1], [0, 0, 1, 1], [], []>} : vector<8x32xbf16>, vector<32x4xbf16>, vector<8x4xf32> -> vector<8x4xf32>
      %c0_108 = arith.constant 0 : index
      %c0_109 = arith.constant 0 : index
      %c0_110 = arith.constant 0 : index
      %164 = vector.load %arg10[%c0_108, %c0_109, %c0_110] : memref<2x1x4xf32, #tpu.memory_space<vmem>>, vector<1x1x4xf32>
      %165 = vector.shape_cast %164 : vector<1x1x4xf32> to vector<1x4xf32>
      %166 = vector.broadcast %165 : vector<1x4xf32> to vector<8x4xf32>
      %167 = arith.addf %163, %166 : vector<8x4xf32>
      %168 = arith.truncf %160 : vector<8x4xf32> to vector<8x4xbf16>
      %c0_111 = arith.constant 0 : index
      %c0_112 = arith.constant 0 : index
      %c0_113 = arith.constant 0 : index
      %169 = vector.load %arg23[%c0_111, %c0_112, %c0_113] : memref<2x8x4xbf16, #tpu.memory_space<vmem>>, vector<1x8x4xbf16>
      %170 = vector.shape_cast %169 : vector<1x8x4xbf16> to vector<8x4xbf16>
      %171 = vector.shape_cast %168 : vector<8x4xbf16> to vector<1x8x4xbf16>
      tpu.vector_store %arg23[%c0_111, %c0_112, %c0_113], %171 {strides = array<i32>} : memref<2x8x4xbf16, #tpu.memory_space<vmem>>, vector<1x8x4xbf16>,
      %172 = arith.truncf %167 : vector<8x4xf32> to vector<8x4xbf16>
      %c0_114 = arith.constant 0 : index
      %c0_115 = arith.constant 0 : index
      %c0_116 = arith.constant 0 : index
      %173 = vector.load %arg24[%c0_114, %c0_115, %c0_116] : memref<2x8x4xbf16, #tpu.memory_space<vmem>>, vector<1x8x4xbf16>
      %174 = vector.shape_cast %173 : vector<1x8x4xbf16> to vector<8x4xbf16>
      %175 = vector.shape_cast %172 : vector<8x4xbf16> to vector<1x8x4xbf16>
      tpu.vector_store %arg24[%c0_114, %c0_115, %c0_116], %175 {strides = array<i32>} : memref<2x8x4xbf16, #tpu.memory_space<vmem>>, vector<1x8x4xbf16>,
      %c1_117 = arith.constant 1 : index
      %c0_118 = arith.constant 0 : index
      %c0_119 = arith.constant 0 : index
      %176 = vector.load %arg7[%c1_117, %c0_118, %c0_119] : memref<2x32x4xbf16, #tpu.memory_space<vmem>>, vector<1x32x4xbf16>
      %177 = vector.shape_cast %176 : vector<1x32x4xbf16> to vector<32x4xbf16>
      %cst_120 = arith.constant dense<0.000000e+00> : vector<8x4xf32>
      %178 = tpu.matmul %153, %177, %cst_120 {dimension_numbers = #tpu.dot_dimension_numbers<[1], [0], [0], [1], [0, 0, 1, 1], [], []>} : vector<8x32xbf16>, vector<32x4xbf16>, vector<8x4xf32> -> vector<8x4xf32>
      %c1_121 = arith.constant 1 : index
      %c0_122 = arith.constant 0 : index
      %c0_123 = arith.constant 0 : index
      %179 = vector.load %arg8[%c1_121, %c0_122, %c0_123] : memref<2x1x4xf32, #tpu.memory_space<vmem>>, vector<1x1x4xf32>
      %180 = vector.shape_cast %179 : vector<1x1x4xf32> to vector<1x4xf32>
      %181 = vector.broadcast %180 : vector<1x4xf32> to vector<8x4xf32>
      %182 = arith.addf %178, %181 : vector<8x4xf32>
      %c1_124 = arith.constant 1 : index
      %c0_125 = arith.constant 0 : index
      %c0_126 = arith.constant 0 : index
      %183 = vector.load %arg9[%c1_124, %c0_125, %c0_126] : memref<2x32x4xbf16, #tpu.memory_space<vmem>>, vector<1x32x4xbf16>
      %184 = vector.shape_cast %183 : vector<1x32x4xbf16> to vector<32x4xbf16>
      %cst_127 = arith.constant dense<0.000000e+00> : vector<8x4xf32>
      %185 = tpu.matmul %153, %184, %cst_127 {dimension_numbers = #tpu.dot_dimension_numbers<[1], [0], [0], [1], [0, 0, 1, 1], [], []>} : vector<8x32xbf16>, vector<32x4xbf16>, vector<8x4xf32> -> vector<8x4xf32>
      %c1_128 = arith.constant 1 : index
      %c0_129 = arith.constant 0 : index
      %c0_130 = arith.constant 0 : index
      %186 = vector.load %arg10[%c1_128, %c0_129, %c0_130] : memref<2x1x4xf32, #tpu.memory_space<vmem>>, vector<1x1x4xf32>
      %187 = vector.shape_cast %186 : vector<1x1x4xf32> to vector<1x4xf32>
      %188 = vector.broadcast %187 : vector<1x4xf32> to vector<8x4xf32>
      %189 = arith.addf %185, %188 : vector<8x4xf32>
      %190 = arith.truncf %182 : vector<8x4xf32> to vector<8x4xbf16>
      %c1_131 = arith.constant 1 : index
      %c0_132 = arith.constant 0 : index
      %c0_133 = arith.constant 0 : index
      %191 = vector.load %arg23[%c1_131, %c0_132, %c0_133] : memref<2x8x4xbf16, #tpu.memory_space<vmem>>, vector<1x8x4xbf16>
      %192 = vector.shape_cast %191 : vector<1x8x4xbf16> to vector<8x4xbf16>
      %193 = vector.shape_cast %190 : vector<8x4xbf16> to vector<1x8x4xbf16>
      tpu.vector_store %arg23[%c1_131, %c0_132, %c0_133], %193 {strides = array<i32>} : memref<2x8x4xbf16, #tpu.memory_space<vmem>>, vector<1x8x4xbf16>,
      %194 = arith.truncf %189 : vector<8x4xf32> to vector<8x4xbf16>
      %c1_134 = arith.constant 1 : index
      %c0_135 = arith.constant 0 : index
      %c0_136 = arith.constant 0 : index
      %195 = vector.load %arg24[%c1_134, %c0_135, %c0_136] : memref<2x8x4xbf16, #tpu.memory_space<vmem>>, vector<1x8x4xbf16>
      %196 = vector.shape_cast %195 : vector<1x8x4xbf16> to vector<8x4xbf16>
      %197 = vector.shape_cast %194 : vector<8x4xbf16> to vector<1x8x4xbf16>
      tpu.vector_store %arg24[%c1_134, %c0_135, %c0_136], %197 {strides = array<i32>} : memref<2x8x4xbf16, #tpu.memory_space<vmem>>, vector<1x8x4xbf16>,
    } else {
    }
    %c0 = arith.constant 0 : index
    %c0_1 = arith.constant 0 : index
    %c0_2 = arith.constant 0 : index
    %3 = vector.load %arg2[%c0, %c0_1, %c0_2] : memref<1x8x32xf32, #tpu.memory_space<vmem>>, vector<1x8x32xf32>
    %4 = vector.shape_cast %3 : vector<1x8x32xf32> to vector<8x32xf32>
    %5 = arith.truncf %4 : vector<8x32xf32> to vector<8x32xbf16>
    %c0_3 = arith.constant 0 : index
    %c0_4 = arith.constant 0 : index
    %c0_5 = arith.constant 0 : index
    %6 = vector.load %arg4[%c0_3, %c0_4, %c0_5] : memref<1x8x8xbf16, #tpu.memory_space<vmem>>, vector<1x8x8xbf16>
    %7 = vector.shape_cast %6 : vector<1x8x8xbf16> to vector<8x8xbf16>
    %cst = arith.constant 0.000000e+00 : bf16
    %8 = vector.broadcast %cst : bf16 to vector<8x8xbf16>
    %9 = arith.cmpf ogt, %7, %8 : vector<8x8xbf16>
    %cst_6 = arith.constant 0.000000e+00 : f32
    %10 = vector.broadcast %cst_6 : f32 to vector<8x32xf32>
    %c0_7 = arith.constant 0 : index
    %c0_8 = arith.constant 0 : index
    %c0_9 = arith.constant 0 : index
    %11 = vector.load %arg5[%c0_7, %c0_8, %c0_9] : memref<2x32x4xbf16, #tpu.memory_space<vmem>>, vector<1x32x4xbf16>
    %12 = vector.shape_cast %11 : vector<1x32x4xbf16> to vector<32x4xbf16>
    %cst_10 = arith.constant dense<0.000000e+00> : vector<8x4xf32>
    %13 = tpu.matmul %5, %12, %cst_10 {dimension_numbers = #tpu.dot_dimension_numbers<[1], [0], [0], [1], [0, 0, 1, 1], [], []>} : vector<8x32xbf16>, vector<32x4xbf16>, vector<8x4xf32> -> vector<8x4xf32>
    %c0_11 = arith.constant 0 : index
    %c0_12 = arith.constant 0 : index
    %c0_13 = arith.constant 0 : index
    %14 = vector.load %arg6[%c0_11, %c0_12, %c0_13] : memref<2x1x4xf32, #tpu.memory_space<vmem>>, vector<1x1x4xf32>
    %15 = vector.shape_cast %14 : vector<1x1x4xf32> to vector<1x4xf32>
    %16 = vector.broadcast %15 : vector<1x4xf32> to vector<8x4xf32>
    %17 = arith.addf %13, %16 : vector<8x4xf32>
    %cst_14 = arith.constant 5.000000e-01 : f32
    %18 = vector.broadcast %cst_14 : f32 to vector<8x4xf32>
    %19 = arith.mulf %17, %18 : vector<8x4xf32>
    %20 = arith.truncf %19 : vector<8x4xf32> to vector<8x4xbf16>
    %c0_15 = arith.constant 0 : index
    %c0_16 = arith.constant 0 : index
    %c0_17 = arith.constant 0 : index
    %21 = vector.load %arg23[%c0_15, %c0_16, %c0_17] : memref<2x8x4xbf16, #tpu.memory_space<vmem>>, vector<1x8x4xbf16>
    %22 = vector.shape_cast %21 : vector<1x8x4xbf16> to vector<8x4xbf16>
    %cst_18 = arith.constant dense<0.000000e+00> : vector<8x8xf32>
    %23 = tpu.matmul %20, %22, %cst_18 {dimension_numbers = #tpu.dot_dimension_numbers<[1], [1], [0], [0], [0, 0, 1, 0], [], []>} : vector<8x4xbf16>, vector<8x4xbf16>, vector<8x8xf32> -> vector<8x8xf32>
    %cst_19 = arith.constant -1.000000e+09 : f32
    %24 = vector.broadcast %cst_19 : f32 to vector<8x8xf32>
    %25 = arith.select %9, %24, %23 : vector<8x8xi1>, vector<8x8xf32>
    %cst_20 = arith.constant dense<0xFF800000> : vector<8xf32>
    %26 = vector.multi_reduction <maximumf>, %25, %cst_20 [1] : vector<8x8xf32> to vector<8xf32>
    %27 = vector.shape_cast %26 : vector<8xf32> to vector<8x1xf32>
    %28 = vector.broadcast %27 : vector<8x1xf32> to vector<8x8xf32>
    %29 = arith.subf %25, %28 : vector<8x8xf32>
    %30 = math.exp %29 : vector<8x8xf32>
    %cst_21 = arith.constant dense<0.000000e+00> : vector<8xf32>
    %31 = vector.multi_reduction <add>, %30, %cst_21 [1] : vector<8x8xf32> to vector<8xf32>
    %32 = vector.shape_cast %31 : vector<8xf32> to vector<8x1xf32>
    %33 = tpu.reciprocal %32 {approx = true} : vector<8x1xf32> -> vector<8x1xf32>
    %34 = vector.broadcast %33 : vector<8x1xf32> to vector<8x8xf32>
    %35 = arith.mulf %30, %34 : vector<8x8xf32>
    %c0_22 = arith.constant 0 : index
    %c0_23 = arith.constant 0 : index
    %c0_24 = arith.constant 0 : index
    %c0_25 = arith.constant 0 : index
    %36 = vector.load %arg22[%c0_22, %c0_23, %c0_24, %c0_25] : memref<1x2x8x8xf32, #tpu.memory_space<vmem>>, vector<1x1x8x8xf32>
    %37 = vector.shape_cast %36 : vector<1x1x8x8xf32> to vector<8x8xf32>
    %38 = vector.shape_cast %35 : vector<8x8xf32> to vector<1x1x8x8xf32>
    tpu.vector_store %arg22[%c0_22, %c0_23, %c0_24, %c0_25], %38 {strides = array<i32>} : memref<1x2x8x8xf32, #tpu.memory_space<vmem>>, vector<1x1x8x8xf32>,
    %39 = arith.truncf %35 : vector<8x8xf32> to vector<8x8xbf16>
    %c0_26 = arith.constant 0 : index
    %c0_27 = arith.constant 0 : index
    %c0_28 = arith.constant 0 : index
    %40 = vector.load %arg24[%c0_26, %c0_27, %c0_28] : memref<2x8x4xbf16, #tpu.memory_space<vmem>>, vector<1x8x4xbf16>
    %41 = vector.shape_cast %40 : vector<1x8x4xbf16> to vector<8x4xbf16>
    %cst_29 = arith.constant dense<0.000000e+00> : vector<8x4xf32>
    %42 = tpu.matmul %39, %41, %cst_29 {dimension_numbers = #tpu.dot_dimension_numbers<[1], [0], [0], [1], [0, 0, 1, 1], [], []>} : vector<8x8xbf16>, vector<8x4xbf16>, vector<8x4xf32> -> vector<8x4xf32>
    %43 = arith.truncf %42 : vector<8x4xf32> to vector<8x4xbf16>
    %c0_30 = arith.constant 0 : index
    %c0_31 = arith.constant 0 : index
    %c0_32 = arith.constant 0 : index
    %44 = vector.load %arg11[%c0_30, %c0_31, %c0_32] : memref<2x4x32xbf16, #tpu.memory_space<vmem>>, vector<1x4x32xbf16>
    %45 = vector.shape_cast %44 : vector<1x4x32xbf16> to vector<4x32xbf16>
    %cst_33 = arith.constant dense<0.000000e+00> : vector<8x32xf32>
    %46 = tpu.matmul %43, %45, %cst_33 {dimension_numbers = #tpu.dot_dimension_numbers<[1], [0], [0], [1], [0, 0, 1, 1], [], []>} : vector<8x4xbf16>, vector<4x32xbf16>, vector<8x32xf32> -> vector<8x32xf32>
    %47 = arith.addf %10, %46 : vector<8x32xf32>
    %c1 = arith.constant 1 : index
    %c0_34 = arith.constant 0 : index
    %c0_35 = arith.constant 0 : index
    %48 = vector.load %arg5[%c1, %c0_34, %c0_35] : memref<2x32x4xbf16, #tpu.memory_space<vmem>>, vector<1x32x4xbf16>
    %49 = vector.shape_cast %48 : vector<1x32x4xbf16> to vector<32x4xbf16>
    %cst_36 = arith.constant dense<0.000000e+00> : vector<8x4xf32>
    %50 = tpu.matmul %5, %49, %cst_36 {dimension_numbers = #tpu.dot_dimension_numbers<[1], [0], [0], [1], [0, 0, 1, 1], [], []>} : vector<8x32xbf16>, vector<32x4xbf16>, vector<8x4xf32> -> vector<8x4xf32>
    %c1_37 = arith.constant 1 : index
    %c0_38 = arith.constant 0 : index
    %c0_39 = arith.constant 0 : index
    %51 = vector.load %arg6[%c1_37, %c0_38, %c0_39] : memref<2x1x4xf32, #tpu.memory_space<vmem>>, vector<1x1x4xf32>
    %52 = vector.shape_cast %51 : vector<1x1x4xf32> to vector<1x4xf32>
    %53 = vector.broadcast %52 : vector<1x4xf32> to vector<8x4xf32>
    %54 = arith.addf %50, %53 : vector<8x4xf32>
    %cst_40 = arith.constant 5.000000e-01 : f32
    %55 = vector.broadcast %cst_40 : f32 to vector<8x4xf32>
    %56 = arith.mulf %54, %55 : vector<8x4xf32>
    %57 = arith.truncf %56 : vector<8x4xf32> to vector<8x4xbf16>
    %c1_41 = arith.constant 1 : index
    %c0_42 = arith.constant 0 : index
    %c0_43 = arith.constant 0 : index
    %58 = vector.load %arg23[%c1_41, %c0_42, %c0_43] : memref<2x8x4xbf16, #tpu.memory_space<vmem>>, vector<1x8x4xbf16>
    %59 = vector.shape_cast %58 : vector<1x8x4xbf16> to vector<8x4xbf16>
    %cst_44 = arith.constant dense<0.000000e+00> : vector<8x8xf32>
    %60 = tpu.matmul %57, %59, %cst_44 {dimension_numbers = #tpu.dot_dimension_numbers<[1], [1], [0], [0], [0, 0, 1, 0], [], []>} : vector<8x4xbf16>, vector<8x4xbf16>, vector<8x8xf32> -> vector<8x8xf32>
    %cst_45 = arith.constant -1.000000e+09 : f32
    %61 = vector.broadcast %cst_45 : f32 to vector<8x8xf32>
    %62 = arith.select %9, %61, %60 : vector<8x8xi1>, vector<8x8xf32>
    %cst_46 = arith.constant dense<0xFF800000> : vector<8xf32>
    %63 = vector.multi_reduction <maximumf>, %62, %cst_46 [1] : vector<8x8xf32> to vector<8xf32>
    %64 = vector.shape_cast %63 : vector<8xf32> to vector<8x1xf32>
    %65 = vector.broadcast %64 : vector<8x1xf32> to vector<8x8xf32>
    %66 = arith.subf %62, %65 : vector<8x8xf32>
    %67 = math.exp %66 : vector<8x8xf32>
    %cst_47 = arith.constant dense<0.000000e+00> : vector<8xf32>
    %68 = vector.multi_reduction <add>, %67, %cst_47 [1] : vector<8x8xf32> to vector<8xf32>
    %69 = vector.shape_cast %68 : vector<8xf32> to vector<8x1xf32>
    %70 = tpu.reciprocal %69 {approx = true} : vector<8x1xf32> -> vector<8x1xf32>
    %71 = vector.broadcast %70 : vector<8x1xf32> to vector<8x8xf32>
    %72 = arith.mulf %67, %71 : vector<8x8xf32>
    %c0_48 = arith.constant 0 : index
    %c1_49 = arith.constant 1 : index
    %c0_50 = arith.constant 0 : index
    %c0_51 = arith.constant 0 : index
    %73 = vector.load %arg22[%c0_48, %c1_49, %c0_50, %c0_51] : memref<1x2x8x8xf32, #tpu.memory_space<vmem>>, vector<1x1x8x8xf32>
    %74 = vector.shape_cast %73 : vector<1x1x8x8xf32> to vector<8x8xf32>
    %75 = vector.shape_cast %72 : vector<8x8xf32> to vector<1x1x8x8xf32>
    tpu.vector_store %arg22[%c0_48, %c1_49, %c0_50, %c0_51], %75 {strides = array<i32>} : memref<1x2x8x8xf32, #tpu.memory_space<vmem>>, vector<1x1x8x8xf32>,
    %76 = arith.truncf %72 : vector<8x8xf32> to vector<8x8xbf16>
    %c1_52 = arith.constant 1 : index
    %c0_53 = arith.constant 0 : index
    %c0_54 = arith.constant 0 : index
    %77 = vector.load %arg24[%c1_52, %c0_53, %c0_54] : memref<2x8x4xbf16, #tpu.memory_space<vmem>>, vector<1x8x4xbf16>
    %78 = vector.shape_cast %77 : vector<1x8x4xbf16> to vector<8x4xbf16>
    %cst_55 = arith.constant dense<0.000000e+00> : vector<8x4xf32>
    %79 = tpu.matmul %76, %78, %cst_55 {dimension_numbers = #tpu.dot_dimension_numbers<[1], [0], [0], [1], [0, 0, 1, 1], [], []>} : vector<8x8xbf16>, vector<8x4xbf16>, vector<8x4xf32> -> vector<8x4xf32>
    %80 = arith.truncf %79 : vector<8x4xf32> to vector<8x4xbf16>
    %c1_56 = arith.constant 1 : index
    %c0_57 = arith.constant 0 : index
    %c0_58 = arith.constant 0 : index
    %81 = vector.load %arg11[%c1_56, %c0_57, %c0_58] : memref<2x4x32xbf16, #tpu.memory_space<vmem>>, vector<1x4x32xbf16>
    %82 = vector.shape_cast %81 : vector<1x4x32xbf16> to vector<4x32xbf16>
    %cst_59 = arith.constant dense<0.000000e+00> : vector<8x32xf32>
    %83 = tpu.matmul %80, %82, %cst_59 {dimension_numbers = #tpu.dot_dimension_numbers<[1], [0], [0], [1], [0, 0, 1, 1], [], []>} : vector<8x4xbf16>, vector<4x32xbf16>, vector<8x32xf32> -> vector<8x32xf32>
    %84 = arith.addf %47, %83 : vector<8x32xf32>
    %c0_60 = arith.constant 0 : index
    %c0_61 = arith.constant 0 : index
    %85 = vector.load %arg12[%c0_60, %c0_61] : memref<1x32xf32, #tpu.memory_space<vmem>>, vector<1x32xf32>
    %86 = vector.broadcast %85 : vector<1x32xf32> to vector<8x32xf32>
    %87 = arith.addf %84, %86 : vector<8x32xf32>
    %88 = arith.addf %4, %87 : vector<8x32xf32>
    %c0_62 = arith.constant 0 : index
    %c0_63 = arith.constant 0 : index
    %89 = vector.load %arg13[%c0_62, %c0_63] : memref<1x32xf32, #tpu.memory_space<vmem>>, vector<1x32xf32>
    %c0_64 = arith.constant 0 : index
    %c0_65 = arith.constant 0 : index
    %90 = vector.load %arg14[%c0_64, %c0_65] : memref<1x32xf32, #tpu.memory_space<vmem>>, vector<1x32xf32>
    %cst_66 = arith.constant dense<0.000000e+00> : vector<8xf32>
    %91 = vector.multi_reduction <add>, %88, %cst_66 [1] : vector<8x32xf32> to vector<8xf32>
    %92 = vector.shape_cast %91 : vector<8xf32> to vector<8x1xf32>
    %cst_67 = arith.constant 3.200000e+01 : f32
    %93 = vector.broadcast %cst_67 : f32 to vector<8x1xf32>
    %94 = arith.divf %92, %93 : vector<8x1xf32>
    %95 = vector.broadcast %94 : vector<8x1xf32> to vector<8x32xf32>
    %96 = arith.subf %88, %95 : vector<8x32xf32>
    %97 = arith.mulf %96, %96 : vector<8x32xf32>
    %cst_68 = arith.constant dense<0.000000e+00> : vector<8xf32>
    %98 = vector.multi_reduction <add>, %97, %cst_68 [1] : vector<8x32xf32> to vector<8xf32>
    %99 = vector.shape_cast %98 : vector<8xf32> to vector<8x1xf32>
    %cst_69 = arith.constant 3.200000e+01 : f32
    %100 = vector.broadcast %cst_69 : f32 to vector<8x1xf32>
    %101 = arith.divf %99, %100 : vector<8x1xf32>
    %cst_70 = arith.constant 9.99999997E-7 : f32
    %102 = vector.broadcast %cst_70 : f32 to vector<8x1xf32>
    %103 = arith.addf %101, %102 : vector<8x1xf32>
    %104 = math.rsqrt %103 : vector<8x1xf32>
    %105 = vector.broadcast %104 : vector<8x1xf32> to vector<8x32xf32>
    %106 = arith.mulf %96, %105 : vector<8x32xf32>
    %107 = vector.broadcast %89 : vector<1x32xf32> to vector<8x32xf32>
    %108 = arith.mulf %106, %107 : vector<8x32xf32>
    %109 = vector.broadcast %90 : vector<1x32xf32> to vector<8x32xf32>
    %110 = arith.addf %108, %109 : vector<8x32xf32>
    %111 = arith.truncf %110 : vector<8x32xf32> to vector<8x32xbf16>
    %c0_71 = arith.constant 0 : index
    %c0_72 = arith.constant 0 : index
    %112 = vector.load %arg15[%c0_71, %c0_72] : memref<32x64xbf16, #tpu.memory_space<vmem>>, vector<32x64xbf16>
    %cst_73 = arith.constant dense<0.000000e+00> : vector<8x64xf32>
    %113 = tpu.matmul %111, %112, %cst_73 {dimension_numbers = #tpu.dot_dimension_numbers<[1], [0], [0], [1], [0, 0, 1, 1], [], []>} : vector<8x32xbf16>, vector<32x64xbf16>, vector<8x64xf32> -> vector<8x64xf32>
    %c0_74 = arith.constant 0 : index
    %c0_75 = arith.constant 0 : index
    %114 = vector.load %arg16[%c0_74, %c0_75] : memref<1x64xf32, #tpu.memory_space<vmem>>, vector<1x64xf32>
    %115 = vector.broadcast %114 : vector<1x64xf32> to vector<8x64xf32>
    %116 = arith.addf %113, %115 : vector<8x64xf32>
    %cst_76 = arith.constant 0.000000e+00 : f32
    %117 = vector.broadcast %cst_76 : f32 to vector<8x64xf32>
    %118 = arith.maximumf %116, %117 : vector<8x64xf32>
    %119 = arith.truncf %118 : vector<8x64xf32> to vector<8x64xbf16>
    %c0_77 = arith.constant 0 : index
    %c0_78 = arith.constant 0 : index
    %120 = vector.load %arg17[%c0_77, %c0_78] : memref<64x32xbf16, #tpu.memory_space<vmem>>, vector<64x32xbf16>
    %cst_79 = arith.constant dense<0.000000e+00> : vector<8x32xf32>
    %121 = tpu.matmul %119, %120, %cst_79 {dimension_numbers = #tpu.dot_dimension_numbers<[1], [0], [0], [1], [0, 0, 1, 1], [], []>} : vector<8x64xbf16>, vector<64x32xbf16>, vector<8x32xf32> -> vector<8x32xf32>
    %c0_80 = arith.constant 0 : index
    %c0_81 = arith.constant 0 : index
    %122 = vector.load %arg18[%c0_80, %c0_81] : memref<1x32xf32, #tpu.memory_space<vmem>>, vector<1x32xf32>
    %123 = vector.broadcast %122 : vector<1x32xf32> to vector<8x32xf32>
    %124 = arith.addf %121, %123 : vector<8x32xf32>
    %125 = arith.addf %110, %124 : vector<8x32xf32>
    %c0_82 = arith.constant 0 : index
    %c0_83 = arith.constant 0 : index
    %126 = vector.load %arg19[%c0_82, %c0_83] : memref<1x32xf32, #tpu.memory_space<vmem>>, vector<1x32xf32>
    %c0_84 = arith.constant 0 : index
    %c0_85 = arith.constant 0 : index
    %127 = vector.load %arg20[%c0_84, %c0_85] : memref<1x32xf32, #tpu.memory_space<vmem>>, vector<1x32xf32>
    %cst_86 = arith.constant dense<0.000000e+00> : vector<8xf32>
    %128 = vector.multi_reduction <add>, %125, %cst_86 [1] : vector<8x32xf32> to vector<8xf32>
    %129 = vector.shape_cast %128 : vector<8xf32> to vector<8x1xf32>
    %cst_87 = arith.constant 3.200000e+01 : f32
    %130 = vector.broadcast %cst_87 : f32 to vector<8x1xf32>
    %131 = arith.divf %129, %130 : vector<8x1xf32>
    %132 = vector.broadcast %131 : vector<8x1xf32> to vector<8x32xf32>
    %133 = arith.subf %125, %132 : vector<8x32xf32>
    %134 = arith.mulf %133, %133 : vector<8x32xf32>
    %cst_88 = arith.constant dense<0.000000e+00> : vector<8xf32>
    %135 = vector.multi_reduction <add>, %134, %cst_88 [1] : vector<8x32xf32> to vector<8xf32>
    %136 = vector.shape_cast %135 : vector<8xf32> to vector<8x1xf32>
    %cst_89 = arith.constant 3.200000e+01 : f32
    %137 = vector.broadcast %cst_89 : f32 to vector<8x1xf32>
    %138 = arith.divf %136, %137 : vector<8x1xf32>
    %cst_90 = arith.constant 9.99999997E-7 : f32
    %139 = vector.broadcast %cst_90 : f32 to vector<8x1xf32>
    %140 = arith.addf %138, %139 : vector<8x1xf32>
    %141 = math.rsqrt %140 : vector<8x1xf32>
    %142 = vector.broadcast %141 : vector<8x1xf32> to vector<8x32xf32>
    %143 = arith.mulf %133, %142 : vector<8x32xf32>
    %144 = vector.broadcast %126 : vector<1x32xf32> to vector<8x32xf32>
    %145 = arith.mulf %143, %144 : vector<8x32xf32>
    %146 = vector.broadcast %127 : vector<1x32xf32> to vector<8x32xf32>
    %147 = arith.addf %145, %146 : vector<8x32xf32>
    %c0_91 = arith.constant 0 : index
    %c0_92 = arith.constant 0 : index
    %c0_93 = arith.constant 0 : index
    %148 = vector.load %arg21[%c0_91, %c0_92, %c0_93] : memref<1x8x32xf32, #tpu.memory_space<vmem>>, vector<1x8x32xf32>
    %149 = vector.shape_cast %148 : vector<1x8x32xf32> to vector<8x32xf32>
    %150 = vector.shape_cast %147 : vector<8x32xf32> to vector<1x8x32xf32>
    tpu.vector_store %arg21[%c0_91, %c0_92, %c0_93], %150 {strides = array<i32>} : memref<1x8x32xf32, #tpu.memory_space<vmem>>, vector<1x8x32xf32>,
    return
  }
  func.func @transform_0(%arg0: i32, %arg1: i32) -> (i32, i32, i32) {
    %c0_i32 = arith.constant 0 : i32
    %c0_i32_0 = arith.constant 0 : i32
    return %arg0, %arg1, %c0_i32 : i32, i32, i32
  }
  func.func @transform_1(%arg0: i32, %arg1: i32) -> (i32, i32, i32) {
    %c0_i32 = arith.constant 0 : i32
    %c0_i32_0 = arith.constant 0 : i32
    %c0_i32_1 = arith.constant 0 : i32
    return %arg0, %c0_i32, %c0_i32_0 : i32, i32, i32
  }
  func.func @transform_2(%arg0: i32, %arg1: i32) -> (i32, i32, i32) {
    %c0_i32 = arith.constant 0 : i32
    %c0_i32_0 = arith.constant 0 : i32
    return %arg0, %arg1, %c0_i32 : i32, i32, i32
  }
  func.func @transform_3(%arg0: i32, %arg1: i32) -> (i32, i32, i32) {
    %c0_i32 = arith.constant 0 : i32
    %c0_i32_0 = arith.constant 0 : i32
    %c0_i32_1 = arith.constant 0 : i32
    %c0_i32_2 = arith.constant 0 : i32
    return %c0_i32, %c0_i32_0, %c0_i32_1 : i32, i32, i32
  }
  func.func @transform_4(%arg0: i32, %arg1: i32) -> (i32, i32, i32) {
    %c0_i32 = arith.constant 0 : i32
    %c0_i32_0 = arith.constant 0 : i32
    %c0_i32_1 = arith.constant 0 : i32
    %c0_i32_2 = arith.constant 0 : i32
    return %c0_i32, %c0_i32_0, %c0_i32_1 : i32, i32, i32
  }
  func.func @transform_5(%arg0: i32, %arg1: i32) -> (i32, i32, i32) {
    %c0_i32 = arith.constant 0 : i32
    %c0_i32_0 = arith.constant 0 : i32
    %c0_i32_1 = arith.constant 0 : i32
    %c0_i32_2 = arith.constant 0 : i32
    return %c0_i32, %c0_i32_0, %c0_i32_1 : i32, i32, i32
  }
  func.func @transform_6(%arg0: i32, %arg1: i32) -> (i32, i32, i32) {
    %c0_i32 = arith.constant 0 : i32
    %c0_i32_0 = arith.constant 0 : i32
    %c0_i32_1 = arith.constant 0 : i32
    %c0_i32_2 = arith.constant 0 : i32
    return %c0_i32, %c0_i32_0, %c0_i32_1 : i32, i32, i32
  }
  func.func @transform_7(%arg0: i32, %arg1: i32) -> (i32, i32, i32) {
    %c0_i32 = arith.constant 0 : i32
    %c0_i32_0 = arith.constant 0 : i32
    %c0_i32_1 = arith.constant 0 : i32
    %c0_i32_2 = arith.constant 0 : i32
    return %c0_i32, %c0_i32_0, %c0_i32_1 : i32, i32, i32
  }
  func.func @transform_8(%arg0: i32, %arg1: i32) -> (i32, i32, i32) {
    %c0_i32 = arith.constant 0 : i32
    %c0_i32_0 = arith.constant 0 : i32
    %c0_i32_1 = arith.constant 0 : i32
    %c0_i32_2 = arith.constant 0 : i32
    return %c0_i32, %c0_i32_0, %c0_i32_1 : i32, i32, i32
  }
  func.func @transform_9(%arg0: i32, %arg1: i32) -> (i32, i32, i32) {
    %c0_i32 = arith.constant 0 : i32
    %c0_i32_0 = arith.constant 0 : i32
    %c0_i32_1 = arith.constant 0 : i32
    %c0_i32_2 = arith.constant 0 : i32
    return %c0_i32, %c0_i32_0, %c0_i32_1 : i32, i32, i32
  }
  func.func @transform_10(%arg0: i32, %arg1: i32) -> (i32, i32) {
    %c0_i32 = arith.constant 0 : i32
    %c0_i32_0 = arith.constant 0 : i32
    %c0_i32_1 = arith.constant 0 : i32
    return %c0_i32, %c0_i32_0 : i32, i32
  }
  func.func @transform_11(%arg0: i32, %arg1: i32) -> (i32, i32) {
    %c0_i32 = arith.constant 0 : i32
    %c0_i32_0 = arith.constant 0 : i32
    %c0_i32_1 = arith.constant 0 : i32
    return %c0_i32, %c0_i32_0 : i32, i32
  }
  func.func @transform_12(%arg0: i32, %arg1: i32) -> (i32, i32) {
    %c0_i32 = arith.constant 0 : i32
    %c0_i32_0 = arith.constant 0 : i32
    %c0_i32_1 = arith.constant 0 : i32
    return %c0_i32, %c0_i32_0 : i32, i32
  }
  func.func @transform_13(%arg0: i32, %arg1: i32) -> (i32, i32) {
    %c0_i32 = arith.constant 0 : i32
    %c0_i32_0 = arith.constant 0 : i32
    %c0_i32_1 = arith.constant 0 : i32
    return %c0_i32, %c0_i32_0 : i32, i32
  }
  func.func @transform_14(%arg0: i32, %arg1: i32) -> (i32, i32) {
    %c0_i32 = arith.constant 0 : i32
    %c0_i32_0 = arith.constant 0 : i32
    %c0_i32_1 = arith.constant 0 : i32
    return %c0_i32, %c0_i32_0 : i32, i32
  }
  func.func @transform_15(%arg0: i32, %arg1: i32) -> (i32, i32) {
    %c0_i32 = arith.constant 0 : i32
    %c0_i32_0 = arith.constant 0 : i32
    %c0_i32_1 = arith.constant 0 : i32
    return %c0_i32, %c0_i32_0 : i32, i32
  }
  func.func @transform_16(%arg0: i32, %arg1: i32) -> (i32, i32) {
    %c0_i32 = arith.constant 0 : i32
    %c0_i32_0 = arith.constant 0 : i32
    %c0_i32_1 = arith.constant 0 : i32
    return %c0_i32, %c0_i32_0 : i32, i32
  }
  func.func @transform_17(%arg0: i32, %arg1: i32) -> (i32, i32) {
    %c0_i32 = arith.constant 0 : i32
    %c0_i32_0 = arith.constant 0 : i32
    %c0_i32_1 = arith.constant 0 : i32
    return %c0_i32, %c0_i32_0 : i32, i32
  }
  func.func @transform_18(%arg0: i32, %arg1: i32) -> (i32, i32) {
    %c0_i32 = arith.constant 0 : i32
    %c0_i32_0 = arith.constant 0 : i32
    %c0_i32_1 = arith.constant 0 : i32
    return %c0_i32, %c0_i32_0 : i32, i32
  }
  func.func @transform_19(%arg0: i32, %arg1: i32) -> (i32, i32, i32) {
    %c0_i32 = arith.constant 0 : i32
    %c0_i32_0 = arith.constant 0 : i32
    return %arg0, %arg1, %c0_i32 : i32, i32, i32
  }
  func.func @transform_20(%arg0: i32, %arg1: i32) -> (i32, i32, i32, i32) {
    %c0_i32 = arith.constant 0 : i32
    %c0_i32_0 = arith.constant 0 : i32
    %c0_i32_1 = arith.constant 0 : i32
    return %arg0, %c0_i32, %arg1, %c0_i32_0 : i32, i32, i32, i32
  }
}

</mosaic_0001>

<llo_original>
// kernel: tpu_custom_call.1
$region0: #{tpu_custom_call.1}
  #allocation0 [shape = 'u32[]', space=smem, size = 0x4, offset = 0x4, fixed_abs, tag = 'smem constant byte address 0x4 - core index']
  #allocation1 [shape = 'u32[144,128]{1,0:T(1,128)}', space=vmem, size = 0x12000, scoped, tag = 'internal scratch']
  #allocation2 [shape = 'bf16[2,8,4]{2,1,0:T(8,128)(2,1)}', space=vmem, size = 0x1000, scoped, tag = 'scratch operand']
  #allocation3 [shape = 'bf16[2,8,4]{2,1,0:T(8,128)(2,1)}', space=vmem, size = 0x1000, scoped, tag = 'scratch operand']
  %s0 = inlined_call_operand.hbm [shape: f32[2,8,32], index: 0, kind: input, shape index: {}]
  %s1 = inlined_call_operand.hbm [shape: f32[2,8,32], index: 1, kind: input, shape index: {}]
  %s2 = inlined_call_operand.hbm [shape: bf16[2,8,8], index: 2, kind: input, shape index: {}]
  %s3 = inlined_call_operand.hbm [shape: bf16[2,32,4], index: 3, kind: input, shape index: {}]
  %s4 = inlined_call_operand.hbm [shape: f32[2,1,4], index: 4, kind: input, shape index: {}]
  %s5 = inlined_call_operand.hbm [shape: bf16[2,32,4], index: 5, kind: input, shape index: {}]
  %s6 = inlined_call_operand.hbm [shape: f32[2,1,4], index: 6, kind: input, shape index: {}]
  %s7 = inlined_call_operand.hbm [shape: bf16[2,32,4], index: 7, kind: input, shape index: {}]
  %s8 = inlined_call_operand.hbm [shape: f32[2,1,4], index: 8, kind: input, shape index: {}]
  %s9 = inlined_call_operand.hbm [shape: bf16[2,4,32], index: 9, kind: input, shape index: {}]
  %s10 = inlined_call_operand.hbm [shape: f32[1,32], index: 10, kind: input, shape index: {}]
  %s11 = inlined_call_operand.hbm [shape: f32[1,32], index: 11, kind: input, shape index: {}]
  %s12 = inlined_call_operand.hbm [shape: f32[1,32], index: 12, kind: input, shape index: {}]
  %s13 = inlined_call_operand.hbm [shape: bf16[32,64], index: 13, kind: input, shape index: {}]
  %s14 = inlined_call_operand.hbm [shape: f32[1,64], index: 14, kind: input, shape index: {}]
  %s15 = inlined_call_operand.hbm [shape: bf16[64,32], index: 15, kind: input, shape index: {}]
  %s16 = inlined_call_operand.hbm [shape: f32[1,32], index: 16, kind: input, shape index: {}]
  %s17 = inlined_call_operand.hbm [shape: f32[1,32], index: 17, kind: input, shape index: {}]
  %s18 = inlined_call_operand.hbm [shape: f32[1,32], index: 18, kind: input, shape index: {}]
  %s19 = inlined_call_operand.hbm [shape: f32[2,8,32], index: 19, kind: output, shape index: {0}]
  %s20 = inlined_call_operand.hbm [shape: f32[2,2,8,8], index: 20, kind: output, shape index: {1}]
  %21 = xla_tuple %s19, %s20
  %s22 = sld [smem:[#allocation0]]
  $region197: #{tpu_custom_call.1} parent=0
    _
  %s24 = ssub.s32 1, %s22
  %s25 = scalar_select 0, %s24, %s22
  $region1: #{tpu_custom_call.1} parent=0
    #allocation4 [shape = 'u8[8192]{0}', space=vmem, size = 0x2000, scoped, tag = 'input window, operand 0']
    #allocation5 [shape = 's32[2]{0}', space=sflag, size = 0x8, scoped, tag = 'scoped memory for tpu_custom_call.1']
    #allocation6 [shape = 's32[2]{0}', space=sflag, size = 0x8, scoped, tag = 'scoped memory for tpu_custom_call.1']
    #allocation7 [shape = 'u8[8192]{0}', space=vmem, size = 0x2000, scoped, tag = 'input window, operand 1']
    #allocation8 [shape = 's32[2]{0}', space=sflag, size = 0x8, scoped, tag = 'scoped memory for tpu_custom_call.1']
    #allocation9 [shape = 'u8[4096]{0}', space=vmem, size = 0x1000, scoped, tag = 'input window, operand 2']
    #allocation10 [shape = 'u8[16384]{0}', space=vmem, size = 0x4000, scoped, tag = 'input window, operand 3, single buffered']
    #allocation11 [shape = 's32[1]{0}', space=sflag, size = 0x4, scoped, tag = 'scoped memory for tpu_custom_call.1']
    #allocation12 [shape = 'u8[1024]{0}', space=vmem, size = 0x400, scoped, tag = 'input window, operand 4, single buffered']
    #allocation13 [shape = 'u8[16384]{0}', space=vmem, size = 0x4000, scoped, tag = 'input window, operand 5, single buffered']
    #allocation14 [shape = 's32[1]{0}', space=sflag, size = 0x4, scoped, tag = 'scoped memory for tpu_custom_call.1']
    #allocation15 [shape = 'u8[1024]{0}', space=vmem, size = 0x400, scoped, tag = 'input window, operand 6, single buffered']
    #allocation16 [shape = 'u8[16384]{0}', space=vmem, size = 0x4000, scoped, tag = 'input window, operand 7, single buffered']
    #allocation17 [shape = 's32[1]{0}', space=sflag, size = 0x4, scoped, tag = 'scoped memory for tpu_custom_call.1']
    #allocation18 [shape = 'u8[1024]{0}', space=vmem, size = 0x400, scoped, tag = 'input window, operand 8, single buffered']
    #allocation19 [shape = 'u8[2048]{0}', space=vmem, size = 0x800, scoped, tag = 'input window, operand 9, single buffered']
    #allocation20 [shape = 's32[1]{0}', space=sflag, size = 0x4, scoped, tag = 'scoped memory for tpu_custom_call.1']
    #allocation21 [shape = 'u8[512]{0}', space=vmem, size = 0x400, scoped, tag = 'input window, operand 10, single buffered']
    #allocation22 [shape = 'u8[512]{0}', space=vmem, size = 0x400, scoped, tag = 'input window, operand 11, single buffered']
    #allocation23 [shape = 's32[1]{0}', space=sflag, size = 0x4, scoped, tag = 'scoped memory for tpu_custom_call.1']
    #allocation24 [shape = 'u8[512]{0}', space=vmem, size = 0x400, scoped, tag = 'input window, operand 12, single buffered']
    #allocation25 [shape = 'u8[8192]{0}', space=vmem, size = 0x2000, scoped, tag = 'input window, operand 13, single buffered']
    #allocation26 [shape = 's32[1]{0}', space=sflag, size = 0x4, scoped, tag = 'scoped memory for tpu_custom_call.1']
    #allocation27 [shape = 'u8[512]{0}', space=vmem, size = 0x400, scoped, tag = 'input window, operand 14, single buffered']
    #allocation28 [shape = 'u8[16384]{0}', space=vmem, size = 0x4000, scoped, tag = 'input window, operand 15, single buffered']
    #allocation29 [shape = 's32[1]{0}', space=sflag, size = 0x4, scoped, tag = 'scoped memory for tpu_custom_call.1']
    #allocation30 [shape = 'u8[512]{0}', space=vmem, size = 0x400, scoped, tag = 'input window, operand 16, single buffered']
    #allocation31 [shape = 'u8[512]{0}', space=vmem, size = 0x400, scoped, tag = 'input window, operand 17, single buffered']
    #allocation32 [shape = 's32[1]{0}', space=sflag, size = 0x4, scoped, tag = 'scoped memory for tpu_custom_call.1']
    #allocation33 [shape = 'u8[512]{0}', space=vmem, size = 0x400, scoped, tag = 'input window, operand 18, single buffered']
    #allocation34 [shape = 'u8[8192]{0}', space=vmem, size = 0x2000, scoped, tag = 'output window, operand 0']
    #allocation35 [shape = 'u8[16384]{0}', space=vmem, size = 0x4000, scoped, tag = 'output window, operand 1']
    #allocation36 [shape = 's32[2]{0}', space=sflag, size = 0x8, scoped, tag = 'scoped memory for tpu_custom_call.1']
    %26 = vsyncpa [#allocation5], 0
    %s27 = scalar_lea.sflag [#allocation5], 1
    %28 = vsyncpa %s27, 0
    %29 = vsyncpa [#allocation8], 0
    %s30 = scalar_lea.sflag [#allocation8], 1
    %31 = vsyncpa %s30, 0
    %32 = vsyncpa [#allocation11], 0
    %33 = vsyncpa [#allocation14], 0
    %34 = vsyncpa [#allocation17], 0
    %35 = vsyncpa [#allocation20], 0
    %36 = vsyncpa [#allocation23], 0
    %37 = vsyncpa [#allocation26], 0
    %38 = vsyncpa [#allocation29], 0
    %39 = vsyncpa [#allocation32], 0
    %40 = vsyncpa [#allocation6], 0
    %s41 = scalar_lea.sflag [#allocation6], 1
    %42 = vsyncpa %s41, 0
    %43 = vsyncpa [#allocation36], 0
    %s44 = scalar_lea.sflag [#allocation36], 1
    %45 = vsyncpa %s44, 0
    loop: start=0, step=1, limit=4
    $region2: #{tpu_custom_call.1} parent=1 // loop_pre_header
      _
    $region3: #{tpu_custom_call.1} parent=1 // loop_header
      %s47 = sphi 0, %s51
      %p48 = scmp.ge.s32.totalorder %s47, 4
      %s54 = sphi 0, %s66
      %s55 = sphi 0, %s62
      %s56 = sphi 0, %s54
      %s57 = sphi 0, %s55
      %s58 = sphi 0, %s56
      %s59 = sphi 0, %s57
      %s71 = sphi 0, %s73
      %s74 = sphi 0, %s71
      %s75 = sphi 0, %s74
      %s91 = sphi 0, %s75
      %s97 = sphi 0, %s99
      %s100 = sphi 0, %s97
      %s101 = sphi 0, %s100
      %s117 = sphi 0, %s101
      %s125 = sphi 0, %s127
      %s128 = sphi 0, %s125
      %s129 = sphi 0, %s128
      %s145 = sphi 0, %s129
      %s149 = sphi 0, %s149
      %s151 = sphi 0, %s149
      %s152 = sphi 0, %s151
      %s166 = sphi 0, %s152
      %s170 = sphi 0, %s170
      %s172 = sphi 0, %s170
      %s173 = sphi 0, %s172
      %s187 = sphi 0, %s173
      %s191 = sphi 0, %s191
      %s193 = sphi 0, %s191
      %s194 = sphi 0, %s193
      %s208 = sphi 0, %s194
      %s212 = sphi 0, %s212
      %s214 = sphi 0, %s212
      %s215 = sphi 0, %s214
      %s229 = sphi 0, %s215
      %s233 = sphi 0, %s233
      %s235 = sphi 0, %s233
      %s236 = sphi 0, %s235
      %s250 = sphi 0, %s236
      %s254 = sphi 0, %s254
      %s256 = sphi 0, %s254
      %s257 = sphi 0, %s256
      %s271 = sphi 0, %s257
      %s275 = sphi 0, %s275
      %s277 = sphi 0, %s275
      %s278 = sphi 0, %s277
      %s292 = sphi 0, %s278
      %s296 = sphi 0, %s296
      %s298 = sphi 0, %s296
      %s299 = sphi 0, %s298
      %s313 = sphi 0, %s299
      %s317 = sphi 0, %s317
      %s319 = sphi 0, %s317
      %s320 = sphi 0, %s319
      %s334 = sphi 0, %s320
      %s338 = sphi 0, %s338
      %s340 = sphi 0, %s338
      %s341 = sphi 0, %s340
      %s355 = sphi 0, %s341
      %s359 = sphi 0, %s359
      %s361 = sphi 0, %s359
      %s362 = sphi 0, %s361
      %s376 = sphi 0, %s362
      %s380 = sphi 0, %s380
      %s382 = sphi 0, %s380
      %s383 = sphi 0, %s382
      %s397 = sphi 0, %s383
      %s401 = sphi 0, %s401
      %s403 = sphi 0, %s401
      %s404 = sphi 0, %s403
      %s418 = sphi 0, %s404
      %s422 = sphi 0, %s422
      %s424 = sphi 0, %s422
      %s425 = sphi 0, %s424
      %s439 = sphi 0, %s425
      %s443 = sphi 0, %s443
      %s445 = sphi 0, %s443
      %s446 = sphi 0, %s445
      %s460 = sphi 0, %s446
      %s464 = sphi 0, %s464
      %s466 = sphi 0, %s464
      %s467 = sphi 0, %s466
      %s481 = sphi 0, %s467
      %s489 = sphi 0, %s491
      %s492 = sphi 0, %s489
      %s493 = sphi 0, %s492
      %s509 = sphi 0, %s493
      %s517 = sphi 0, %s519
      %s520 = sphi 0, %s517
      %s521 = sphi 0, %s520
      %s537 = sphi 0, %s521
    $region4: #{tpu_custom_call.1} parent=1 // loop_header_branch
      %50 = sbr.rel (%p48) target = $region8
    $region5: #{tpu_custom_call.1} parent=1 // loop_body
      %s52 = ssub.s32 %s47, 1
      %s53 = ssub.s32 %s47, 2
      %s60 = sadd.s32 1, %s55
      %p61 = scmp.ge.s32.totalorder %s60, 1
      %s62 = scalar_select %p61, 0, %s60
      %s63 = sadd.s32 1, %s54
      %s64 = scalar_select %p61, %s63, %s54
      %p65 = scmp.ge.s32.totalorder %s64, 2
      %s66 = scalar_select %p65, 0, %s64
      %s67 = ssub.s32 %s54, %s66
      %s68 = ssub.s32 %s55, %s62
      %s69 = sor.u32 %s67, %s68
      %p70 = scmp.eq.s32.totalorder %s69, 0
      %s72 = sadd.s32 %s71, 1
      %s73 = scalar_select %p70, %s71, %s72
      %p76 = pneg %p70
      %p77 = scmp.eq.s32.totalorder %s47, 1
      %p78 = por %p76, %p77
      %p79 = scmp.ne.s32.totalorder %s71, %s74
      %p80 = scmp.eq.s32.totalorder %s47, 0
      %p81 = por %p79, %p80
      %p82 = scmp.ne.s32.totalorder %s71, %s74
      %p83 = scmp.eq.s32.totalorder %s52, 1
      %p84 = por %p82, %p83
      %p85 = scmp.ne.s32.totalorder %s74, %s75
      %p86 = scmp.eq.s32.totalorder %s52, 0
      %p87 = por %p85, %p86
      %p88 = scmp.ne.s32.totalorder %s74, %s75
      %p89 = scmp.eq.s32.totalorder %s53, 1
      %p90 = por %p88, %p89
      %p92 = scmp.ne.s32.totalorder %s75, %s91
      %p93 = scmp.eq.s32.totalorder %s53, 0
      %p94 = por %p92, %p93
      %s95 = ssub.s32 %s54, %s66
      %p96 = scmp.eq.s32.totalorder %s95, 0
      %s98 = sadd.s32 %s97, 1
      %s99 = scalar_select %p96, %s97, %s98
      %p102 = pneg %p96
      %p103 = scmp.eq.s32.totalorder %s47, 1
      %p104 = por %p102, %p103
      %p105 = scmp.ne.s32.totalorder %s97, %s100
      %p106 = scmp.eq.s32.totalorder %s47, 0
      %p107 = por %p105, %p106
      %p108 = scmp.ne.s32.totalorder %s97, %s100
      %p109 = scmp.eq.s32.totalorder %s52, 1
      %p110 = por %p108, %p109
      %p111 = scmp.ne.s32.totalorder %s100, %s101
      %p112 = scmp.eq.s32.totalorder %s52, 0
      %p113 = por %p111, %p112
      %p114 = scmp.ne.s32.totalorder %s100, %s101
      %p115 = scmp.eq.s32.totalorder %s53, 1
      %p116 = por %p114, %p115
      %p118 = scmp.ne.s32.totalorder %s101, %s117
      %p119 = scmp.eq.s32.totalorder %s53, 0
      %p120 = por %p118, %p119
      %s121 = ssub.s32 %s54, %s66
      %s122 = ssub.s32 %s55, %s62
      %s123 = sor.u32 %s121, %s122
      %p124 = scmp.eq.s32.totalorder %s123, 0
      %s126 = sadd.s32 %s125, 1
      %s127 = scalar_select %p124, %s125, %s126
      %p130 = pneg %p124
      %p131 = scmp.eq.s32.totalorder %s47, 1
      %p132 = por %p130, %p131
      %p133 = scmp.ne.s32.totalorder %s125, %s128
      %p134 = scmp.eq.s32.totalorder %s47, 0
      %p135 = por %p133, %p134
      %p136 = scmp.ne.s32.totalorder %s125, %s128
      %p137 = scmp.eq.s32.totalorder %s52, 1
      %p138 = por %p136, %p137
      %p139 = scmp.ne.s32.totalorder %s128, %s129
      %p140 = scmp.eq.s32.totalorder %s52, 0
      %p141 = por %p139, %p140
      %p142 = scmp.ne.s32.totalorder %s128, %s129
      %p143 = scmp.eq.s32.totalorder %s53, 1
      %p144 = por %p142, %p143
      %p146 = scmp.ne.s32.totalorder %s129, %s145
      %p147 = scmp.eq.s32.totalorder %s53, 0
      %p148 = por %p146, %p147
      %s150 = sadd.s32 %s149, 1
      %p153 = scmp.eq.s32.totalorder %s47, 1
      %p154 = scmp.ne.s32.totalorder %s149, %s151
      %p155 = scmp.eq.s32.totalorder %s47, 0
      %p156 = por %p154, %p155
      %p157 = scmp.ne.s32.totalorder %s149, %s151
      %p158 = scmp.eq.s32.totalorder %s52, 1
      %p159 = por %p157, %p158
      %p160 = scmp.ne.s32.totalorder %s151, %s152
      %p161 = scmp.eq.s32.totalorder %s52, 0
      %p162 = por %p160, %p161
      %p163 = scmp.ne.s32.totalorder %s151, %s152
      %p164 = scmp.eq.s32.totalorder %s53, 1
      %p165 = por %p163, %p164
      %p167 = scmp.ne.s32.totalorder %s152, %s166
      %p168 = scmp.eq.s32.totalorder %s53, 0
      %p169 = por %p167, %p168
      %s171 = sadd.s32 %s170, 1
      %p174 = scmp.eq.s32.totalorder %s47, 1
      %p175 = scmp.ne.s32.totalorder %s170, %s172
      %p176 = scmp.eq.s32.totalorder %s47, 0
      %p177 = por %p175, %p176
      %p178 = scmp.ne.s32.totalorder %s170, %s172
      %p179 = scmp.eq.s32.totalorder %s52, 1
      %p180 = por %p178, %p179
      %p181 = scmp.ne.s32.totalorder %s172, %s173
      %p182 = scmp.eq.s32.totalorder %s52, 0
      %p183 = por %p181, %p182
      %p184 = scmp.ne.s32.totalorder %s172, %s173
      %p185 = scmp.eq.s32.totalorder %s53, 1
      %p186 = por %p184, %p185
      %p188 = scmp.ne.s32.totalorder %s173, %s187
      %p189 = scmp.eq.s32.totalorder %s53, 0
      %p190 = por %p188, %p189
      %s192 = sadd.s32 %s191, 1
      %p195 = scmp.eq.s32.totalorder %s47, 1
      %p196 = scmp.ne.s32.totalorder %s191, %s193
      %p197 = scmp.eq.s32.totalorder %s47, 0
      %p198 = por %p196, %p197
      %p199 = scmp.ne.s32.totalorder %s191, %s193
      %p200 = scmp.eq.s32.totalorder %s52, 1
      %p201 = por %p199, %p200
      %p202 = scmp.ne.s32.totalorder %s193, %s194
      %p203 = scmp.eq.s32.totalorder %s52, 0
      %p204 = por %p202, %p203
      %p205 = scmp.ne.s32.totalorder %s193, %s194
      %p206 = scmp.eq.s32.totalorder %s53, 1
      %p207 = por %p205, %p206
      %p209 = scmp.ne.s32.totalorder %s194, %s208
      %p210 = scmp.eq.s32.totalorder %s53, 0
      %p211 = por %p209, %p210
      %s213 = sadd.s32 %s212, 1
      %p216 = scmp.eq.s32.totalorder %s47, 1
      %p217 = scmp.ne.s32.totalorder %s212, %s214
      %p218 = scmp.eq.s32.totalorder %s47, 0
      %p219 = por %p217, %p218
      %p220 = scmp.ne.s32.totalorder %s212, %s214
      %p221 = scmp.eq.s32.totalorder %s52, 1
      %p222 = por %p220, %p221
      %p223 = scmp.ne.s32.totalorder %s214, %s215
      %p224 = scmp.eq.s32.totalorder %s52, 0
      %p225 = por %p223, %p224
      %p226 = scmp.ne.s32.totalorder %s214, %s215
      %p227 = scmp.eq.s32.totalorder %s53, 1
      %p228 = por %p226, %p227
      %p230 = scmp.ne.s32.totalorder %s215, %s229
      %p231 = scmp.eq.s32.totalorder %s53, 0
      %p232 = por %p230, %p231
      %s234 = sadd.s32 %s233, 1
      %p237 = scmp.eq.s32.totalorder %s47, 1
      %p238 = scmp.ne.s32.totalorder %s233, %s235
      %p239 = scmp.eq.s32.totalorder %s47, 0
      %p240 = por %p238, %p239
      %p241 = scmp.ne.s32.totalorder %s233, %s235
      %p242 = scmp.eq.s32.totalorder %s52, 1
      %p243 = por %p241, %p242
      %p244 = scmp.ne.s32.totalorder %s235, %s236
      %p245 = scmp.eq.s32.totalorder %s52, 0
      %p246 = por %p244, %p245
      %p247 = scmp.ne.s32.totalorder %s235, %s236
      %p248 = scmp.eq.s32.totalorder %s53, 1
      %p249 = por %p247, %p248
      %p251 = scmp.ne.s32.totalorder %s236, %s250
      %p252 = scmp.eq.s32.totalorder %s53, 0
      %p253 = por %p251, %p252
      %s255 = sadd.s32 %s254, 1
      %p258 = scmp.eq.s32.totalorder %s47, 1
      %p259 = scmp.ne.s32.totalorder %s254, %s256
      %p260 = scmp.eq.s32.totalorder %s47, 0
      %p261 = por %p259, %p260
      %p262 = scmp.ne.s32.totalorder %s254, %s256
      %p263 = scmp.eq.s32.totalorder %s52, 1
      %p264 = por %p262, %p263
      %p265 = scmp.ne.s32.totalorder %s256, %s257
      %p266 = scmp.eq.s32.totalorder %s52, 0
      %p267 = por %p265, %p266
      %p268 = scmp.ne.s32.totalorder %s256, %s257
      %p269 = scmp.eq.s32.totalorder %s53, 1
      %p270 = por %p268, %p269
      %p272 = scmp.ne.s32.totalorder %s257, %s271
      %p273 = scmp.eq.s32.totalorder %s53, 0
      %p274 = por %p272, %p273
      %s276 = sadd.s32 %s275, 1
      %p279 = scmp.eq.s32.totalorder %s47, 1
      %p280 = scmp.ne.s32.totalorder %s275, %s277
      %p281 = scmp.eq.s32.totalorder %s47, 0
      %p282 = por %p280, %p281
      %p283 = scmp.ne.s32.totalorder %s275, %s277
      %p284 = scmp.eq.s32.totalorder %s52, 1
      %p285 = por %p283, %p284
      %p286 = scmp.ne.s32.totalorder %s277, %s278
      %p287 = scmp.eq.s32.totalorder %s52, 0
      %p288 = por %p286, %p287
      %p289 = scmp.ne.s32.totalorder %s277, %s278
      %p290 = scmp.eq.s32.totalorder %s53, 1
      %p291 = por %p289, %p290
      %p293 = scmp.ne.s32.totalorder %s278, %s292
      %p294 = scmp.eq.s32.totalorder %s53, 0
      %p295 = por %p293, %p294
      %s297 = sadd.s32 %s296, 1
      %p300 = scmp.eq.s32.totalorder %s47, 1
      %p301 = scmp.ne.s32.totalorder %s296, %s298
      %p302 = scmp.eq.s32.totalorder %s47, 0
      %p303 = por %p301, %p302
      %p304 = scmp.ne.s32.totalorder %s296, %s298
      %p305 = scmp.eq.s32.totalorder %s52, 1
      %p306 = por %p304, %p305
      %p307 = scmp.ne.s32.totalorder %s298, %s299
      %p308 = scmp.eq.s32.totalorder %s52, 0
      %p309 = por %p307, %p308
      %p310 = scmp.ne.s32.totalorder %s298, %s299
      %p311 = scmp.eq.s32.totalorder %s53, 1
      %p312 = por %p310, %p311
      %p314 = scmp.ne.s32.totalorder %s299, %s313
      %p315 = scmp.eq.s32.totalorder %s53, 0
      %p316 = por %p314, %p315
      %s318 = sadd.s32 %s317, 1
      %p321 = scmp.eq.s32.totalorder %s47, 1
      %p322 = scmp.ne.s32.totalorder %s317, %s319
      %p323 = scmp.eq.s32.totalorder %s47, 0
      %p324 = por %p322, %p323
      %p325 = scmp.ne.s32.totalorder %s317, %s319
      %p326 = scmp.eq.s32.totalorder %s52, 1
      %p327 = por %p325, %p326
      %p328 = scmp.ne.s32.totalorder %s319, %s320
      %p329 = scmp.eq.s32.totalorder %s52, 0
      %p330 = por %p328, %p329
      %p331 = scmp.ne.s32.totalorder %s319, %s320
      %p332 = scmp.eq.s32.totalorder %s53, 1
      %p333 = por %p331, %p332
      %p335 = scmp.ne.s32.totalorder %s320, %s334
      %p336 = scmp.eq.s32.totalorder %s53, 0
      %p337 = por %p335, %p336
      %s339 = sadd.s32 %s338, 1
      %p342 = scmp.eq.s32.totalorder %s47, 1
      %p343 = scmp.ne.s32.totalorder %s338, %s340
      %p344 = scmp.eq.s32.totalorder %s47, 0
      %p345 = por %p343, %p344
      %p346 = scmp.ne.s32.totalorder %s338, %s340
      %p347 = scmp.eq.s32.totalorder %s52, 1
      %p348 = por %p346, %p347
      %p349 = scmp.ne.s32.totalorder %s340, %s341
      %p350 = scmp.eq.s32.totalorder %s52, 0
      %p351 = por %p349, %p350
      %p352 = scmp.ne.s32.totalorder %s340, %s341
      %p353 = scmp.eq.s32.totalorder %s53, 1
      %p354 = por %p352, %p353
      %p356 = scmp.ne.s32.totalorder %s341, %s355
      %p357 = scmp.eq.s32.totalorder %s53, 0
      %p358 = por %p356, %p357
      %s360 = sadd.s32 %s359, 1
      %p363 = scmp.eq.s32.totalorder %s47, 1
      %p364 = scmp.ne.s32.totalorder %s359, %s361
      %p365 = scmp.eq.s32.totalorder %s47, 0
      %p366 = por %p364, %p365
      %p367 = scmp.ne.s32.totalorder %s359, %s361
      %p368 = scmp.eq.s32.totalorder %s52, 1
      %p369 = por %p367, %p368
      %p370 = scmp.ne.s32.totalorder %s361, %s362
      %p371 = scmp.eq.s32.totalorder %s52, 0
      %p372 = por %p370, %p371
      %p373 = scmp.ne.s32.totalorder %s361, %s362
      %p374 = scmp.eq.s32.totalorder %s53, 1
      %p375 = por %p373, %p374
      %p377 = scmp.ne.s32.totalorder %s362, %s376
      %p378 = scmp.eq.s32.totalorder %s53, 0
      %p379 = por %p377, %p378
      %s381 = sadd.s32 %s380, 1
      %p384 = scmp.eq.s32.totalorder %s47, 1
      %p385 = scmp.ne.s32.totalorder %s380, %s382
      %p386 = scmp.eq.s32.totalorder %s47, 0
      %p387 = por %p385, %p386
      %p388 = scmp.ne.s32.totalorder %s380, %s382
      %p389 = scmp.eq.s32.totalorder %s52, 1
      %p390 = por %p388, %p389
      %p391 = scmp.ne.s32.totalorder %s382, %s383
      %p392 = scmp.eq.s32.totalorder %s52, 0
      %p393 = por %p391, %p392
      %p394 = scmp.ne.s32.totalorder %s382, %s383
      %p395 = scmp.eq.s32.totalorder %s53, 1
      %p396 = por %p394, %p395
      %p398 = scmp.ne.s32.totalorder %s383, %s397
      %p399 = scmp.eq.s32.totalorder %s53, 0
      %p400 = por %p398, %p399
      %s402 = sadd.s32 %s401, 1
      %p405 = scmp.eq.s32.totalorder %s47, 1
      %p406 = scmp.ne.s32.totalorder %s401, %s403
      %p407 = scmp.eq.s32.totalorder %s47, 0
      %p408 = por %p406, %p407
      %p409 = scmp.ne.s32.totalorder %s401, %s403
      %p410 = scmp.eq.s32.totalorder %s52, 1
      %p411 = por %p409, %p410
      %p412 = scmp.ne.s32.totalorder %s403, %s404
      %p413 = scmp.eq.s32.totalorder %s52, 0
      %p414 = por %p412, %p413
      %p415 = scmp.ne.s32.totalorder %s403, %s404
      %p416 = scmp.eq.s32.totalorder %s53, 1
      %p417 = por %p415, %p416
      %p419 = scmp.ne.s32.totalorder %s404, %s418
      %p420 = scmp.eq.s32.totalorder %s53, 0
      %p421 = por %p419, %p420
      %s423 = sadd.s32 %s422, 1
      %p426 = scmp.eq.s32.totalorder %s47, 1
      %p427 = scmp.ne.s32.totalorder %s422, %s424
      %p428 = scmp.eq.s32.totalorder %s47, 0
      %p429 = por %p427, %p428
      %p430 = scmp.ne.s32.totalorder %s422, %s424
      %p431 = scmp.eq.s32.totalorder %s52, 1
      %p432 = por %p430, %p431
      %p433 = scmp.ne.s32.totalorder %s424, %s425
      %p434 = scmp.eq.s32.totalorder %s52, 0
      %p435 = por %p433, %p434
      %p436 = scmp.ne.s32.totalorder %s424, %s425
      %p437 = scmp.eq.s32.totalorder %s53, 1
      %p438 = por %p436, %p437
      %p440 = scmp.ne.s32.totalorder %s425, %s439
      %p441 = scmp.eq.s32.totalorder %s53, 0
      %p442 = por %p440, %p441
      %s444 = sadd.s32 %s443, 1
      %p447 = scmp.eq.s32.totalorder %s47, 1
      %p448 = scmp.ne.s32.totalorder %s443, %s445
      %p449 = scmp.eq.s32.totalorder %s47, 0
      %p450 = por %p448, %p449
      %p451 = scmp.ne.s32.totalorder %s443, %s445
      %p452 = scmp.eq.s32.totalorder %s52, 1
      %p453 = por %p451, %p452
      %p454 = scmp.ne.s32.totalorder %s445, %s446
      %p455 = scmp.eq.s32.totalorder %s52, 0
      %p456 = por %p454, %p455
      %p457 = scmp.ne.s32.totalorder %s445, %s446
      %p458 = scmp.eq.s32.totalorder %s53, 1
      %p459 = por %p457, %p458
      %p461 = scmp.ne.s32.totalorder %s446, %s460
      %p462 = scmp.eq.s32.totalorder %s53, 0
      %p463 = por %p461, %p462
      %s465 = sadd.s32 %s464, 1
      %p468 = scmp.eq.s32.totalorder %s47, 1
      %p469 = scmp.ne.s32.totalorder %s464, %s466
      %p470 = scmp.eq.s32.totalorder %s47, 0
      %p471 = por %p469, %p470
      %p472 = scmp.ne.s32.totalorder %s464, %s466
      %p473 = scmp.eq.s32.totalorder %s52, 1
      %p474 = por %p472, %p473
      %p475 = scmp.ne.s32.totalorder %s466, %s467
      %p476 = scmp.eq.s32.totalorder %s52, 0
      %p477 = por %p475, %p476
      %p478 = scmp.ne.s32.totalorder %s466, %s467
      %p479 = scmp.eq.s32.totalorder %s53, 1
      %p480 = por %p478, %p479
      %p482 = scmp.ne.s32.totalorder %s467, %s481
      %p483 = scmp.eq.s32.totalorder %s53, 0
      %p484 = por %p482, %p483
      %s485 = ssub.s32 %s54, %s66
      %s486 = ssub.s32 %s55, %s62
      %s487 = sor.u32 %s485, %s486
      %p488 = scmp.eq.s32.totalorder %s487, 0
      %s490 = sadd.s32 %s489, 1
      %s491 = scalar_select %p488, %s489, %s490
      %p494 = pneg %p488
      %p495 = scmp.eq.s32.totalorder %s47, 1
      %p496 = por %p494, %p495
      %p497 = scmp.ne.s32.totalorder %s489, %s492
      %p498 = scmp.eq.s32.totalorder %s47, 0
      %p499 = por %p497, %p498
      %p500 = scmp.ne.s32.totalorder %s489, %s492
      %p501 = scmp.eq.s32.totalorder %s52, 1
      %p502 = por %p500, %p501
      %p503 = scmp.ne.s32.totalorder %s492, %s493
      %p504 = scmp.eq.s32.totalorder %s52, 0
      %p505 = por %p503, %p504
      %p506 = scmp.ne.s32.totalorder %s492, %s493
      %p507 = scmp.eq.s32.totalorder %s53, 1
      %p508 = por %p506, %p507
      %p510 = scmp.ne.s32.totalorder %s493, %s509
      %p511 = scmp.eq.s32.totalorder %s53, 0
      %p512 = por %p510, %p511
      %s513 = ssub.s32 %s54, %s66
      %s514 = ssub.s32 %s55, %s62
      %s515 = sor.u32 %s513, %s514
      %p516 = scmp.eq.s32.totalorder %s515, 0
      %s518 = sadd.s32 %s517, 1
      %s519 = scalar_select %p516, %s517, %s518
      %p522 = pneg %p516
      %p523 = scmp.eq.s32.totalorder %s47, 1
      %p524 = por %p522, %p523
      %p525 = scmp.ne.s32.totalorder %s517, %s520
      %p526 = scmp.eq.s32.totalorder %s47, 0
      %p527 = por %p525, %p526
      %p528 = scmp.ne.s32.totalorder %s517, %s520
      %p529 = scmp.eq.s32.totalorder %s52, 1
      %p530 = por %p528, %p529
      %p531 = scmp.ne.s32.totalorder %s520, %s521
      %p532 = scmp.eq.s32.totalorder %s52, 0
      %p533 = por %p531, %p532
      %p534 = scmp.ne.s32.totalorder %s520, %s521
      %p535 = scmp.eq.s32.totalorder %s53, 1
      %p536 = por %p534, %p535
      %p538 = scmp.ne.s32.totalorder %s521, %s537
      %p539 = scmp.eq.s32.totalorder %s53, 0
      %p540 = por %p538, %p539
      %p541 = scmp.le.s32.totalorder 1, %s47
      %p542 = scmp.lt.s32.totalorder %s47, 3
      %p543 = pnand %p541, %p542
      %p544 = pneg %p543
      // Predicated region
      $region9: #{tpu_custom_call.1} parent=5 // pred_check
        _
      $region10: #{tpu_custom_call.1} parent=5 // pred_check_branch
        %546 = sbr.rel (%p543) target = $region12
      $region11: #{tpu_custom_call.1} parent=5 // pred_region
        %s547 = ssub.s32 %s47, 1
        // Predicated region
        $region13: #{tpu_custom_call.1} parent=11 // pred_check
          %p548 = pneg %p162
        $region14: #{tpu_custom_call.1} parent=11 // pred_check_branch
          %550 = sbr.rel (%p548) target = $region16
        $region15: #{tpu_custom_call.1} parent=11 // pred_region
          %s552 = ssub.s32 512, 512
          %553 = vsyncadd [#allocation11], %s552
          %s554 = sshll.u32 [#allocation10], 4
          %s555 = int_to_ptr.vmem [resolvable:$true] %s554
          %560 = dma.hbm_to_vmem [thread:$0]  %s3, 512, %s555, [#allocation11], 64, 64, 4
        $region16: #{tpu_custom_call.1} parent=11 // pred_fallthru
          _
        // Predicated region
        $region17: #{tpu_custom_call.1} parent=11 // pred_check
          %p561 = pneg %p183
        $region18: #{tpu_custom_call.1} parent=11 // pred_check_branch
          %563 = sbr.rel (%p561) target = $region20
        $region19: #{tpu_custom_call.1} parent=11 // pred_region
          %s565 = ssub.s32 32, 32
          %566 = vsyncadd [#allocation11], %s565
          %s567 = sshll.u32 [#allocation12], 4
          %s568 = int_to_ptr.vmem [resolvable:$true] %s567
          %573 = dma.hbm_to_vmem [thread:$0]  %s4, 32, %s568, [#allocation11], 16, 16, 1
        $region20: #{tpu_custom_call.1} parent=11 // pred_fallthru
          _
        // Predicated region
        $region21: #{tpu_custom_call.1} parent=11 // pred_check
          %p574 = pneg %p204
        $region22: #{tpu_custom_call.1} parent=11 // pred_check_branch
          %576 = sbr.rel (%p574) target = $region24
        $region23: #{tpu_custom_call.1} parent=11 // pred_region
          %s578 = ssub.s32 512, 512
          %579 = vsyncadd [#allocation14], %s578
          %s580 = sshll.u32 [#allocation13], 4
          %s581 = int_to_ptr.vmem [resolvable:$true] %s580
          %586 = dma.hbm_to_vmem [thread:$0]  %s5, 512, %s581, [#allocation14], 64, 64, 4
        $region24: #{tpu_custom_call.1} parent=11 // pred_fallthru
          _
        // Predicated region
        $region25: #{tpu_custom_call.1} parent=11 // pred_check
          %p587 = pneg %p225
        $region26: #{tpu_custom_call.1} parent=11 // pred_check_branch
          %589 = sbr.rel (%p587) target = $region28
        $region27: #{tpu_custom_call.1} parent=11 // pred_region
          %s591 = ssub.s32 32, 32
          %592 = vsyncadd [#allocation14], %s591
          %s593 = sshll.u32 [#allocation15], 4
          %s594 = int_to_ptr.vmem [resolvable:$true] %s593
          %599 = dma.hbm_to_vmem [thread:$0]  %s6, 32, %s594, [#allocation14], 16, 16, 1
        $region28: #{tpu_custom_call.1} parent=11 // pred_fallthru
          _
        // Predicated region
        $region29: #{tpu_custom_call.1} parent=11 // pred_check
          %p600 = pneg %p246
        $region30: #{tpu_custom_call.1} parent=11 // pred_check_branch
          %602 = sbr.rel (%p600) target = $region32
        $region31: #{tpu_custom_call.1} parent=11 // pred_region
          %s604 = ssub.s32 512, 512
          %605 = vsyncadd [#allocation17], %s604
          %s606 = sshll.u32 [#allocation16], 4
          %s607 = int_to_ptr.vmem [resolvable:$true] %s606
          %612 = dma.hbm_to_vmem [thread:$0]  %s7, 512, %s607, [#allocation17], 64, 64, 4
        $region32: #{tpu_custom_call.1} parent=11 // pred_fallthru
          _
        // Predicated region
        $region33: #{tpu_custom_call.1} parent=11 // pred_check
          %p613 = pneg %p267
        $region34: #{tpu_custom_call.1} parent=11 // pred_check_branch
          %615 = sbr.rel (%p613) target = $region36
        $region35: #{tpu_custom_call.1} parent=11 // pred_region
          %s617 = ssub.s32 32, 32
          %618 = vsyncadd [#allocation17], %s617
          %s619 = sshll.u32 [#allocation18], 4
          %s620 = int_to_ptr.vmem [resolvable:$true] %s619
          %625 = dma.hbm_to_vmem [thread:$0]  %s8, 32, %s620, [#allocation17], 16, 16, 1
        $region36: #{tpu_custom_call.1} parent=11 // pred_fallthru
          _
        // Predicated region
        $region37: #{tpu_custom_call.1} parent=11 // pred_check
          %p626 = pneg %p288
        $region38: #{tpu_custom_call.1} parent=11 // pred_check_branch
          %628 = sbr.rel (%p626) target = $region40
        $region39: #{tpu_custom_call.1} parent=11 // pred_region
          %s630 = ssub.s32 64, 64
          %631 = vsyncadd [#allocation20], %s630
          %s632 = sshll.u32 [#allocation19], 4
          %s633 = int_to_ptr.vmem [resolvable:$true] %s632
          %638 = dma.hbm_to_vmem [thread:$0]  %s9, 64, %s633, [#allocation20], 32, 32, 2
        $region40: #{tpu_custom_call.1} parent=11 // pred_fallthru
          _
        // Predicated region
        $region41: #{tpu_custom_call.1} parent=11 // pred_check
          %p639 = pneg %p309
        $region42: #{tpu_custom_call.1} parent=11 // pred_check_branch
          %641 = sbr.rel (%p639) target = $region44
        $region43: #{tpu_custom_call.1} parent=11 // pred_region
          %s643 = ssub.s32 16, 16
          %644 = vsyncadd [#allocation20], %s643
          %s646 = sshll.u32 [#allocation21], 4
          %s647 = int_to_ptr.vmem [resolvable:$true] %s646
          %649 = dma.hbm_to_vmem [thread:$0]  %s10, 16, %s647, [#allocation20]
        $region44: #{tpu_custom_call.1} parent=11 // pred_fallthru
          _
        // Predicated region
        $region45: #{tpu_custom_call.1} parent=11 // pred_check
          %p650 = pneg %p330
        $region46: #{tpu_custom_call.1} parent=11 // pred_check_branch
          %652 = sbr.rel (%p650) target = $region48
        $region47: #{tpu_custom_call.1} parent=11 // pred_region
          %s654 = ssub.s32 16, 16
          %655 = vsyncadd [#allocation23], %s654
          %s657 = sshll.u32 [#allocation22], 4
          %s658 = int_to_ptr.vmem [resolvable:$true] %s657
          %660 = dma.hbm_to_vmem [thread:$0]  %s11, 16, %s658, [#allocation23]
        $region48: #{tpu_custom_call.1} parent=11 // pred_fallthru
          _
        // Predicated region
        $region49: #{tpu_custom_call.1} parent=11 // pred_check
          %p661 = pneg %p351
        $region50: #{tpu_custom_call.1} parent=11 // pred_check_branch
          %663 = sbr.rel (%p661) target = $region52
        $region51: #{tpu_custom_call.1} parent=11 // pred_region
          %s665 = ssub.s32 16, 16
          %666 = vsyncadd [#allocation23], %s665
          %s668 = sshll.u32 [#allocation24], 4
          %s669 = int_to_ptr.vmem [resolvable:$true] %s668
          %671 = dma.hbm_to_vmem [thread:$0]  %s12, 16, %s669, [#allocation23]
        $region52: #{tpu_custom_call.1} parent=11 // pred_fallthru
          _
        // Predicated region
        $region53: #{tpu_custom_call.1} parent=11 // pred_check
          %p672 = pneg %p372
        $region54: #{tpu_custom_call.1} parent=11 // pred_check_branch
          %674 = sbr.rel (%p672) target = $region56
        $region55: #{tpu_custom_call.1} parent=11 // pred_region
          %s676 = ssub.s32 256, 256
          %677 = vsyncadd [#allocation26], %s676
          %s678 = sshll.u32 [#allocation25], 4
          %s679 = int_to_ptr.vmem [resolvable:$true] %s678
          %684 = dma.hbm_to_vmem [thread:$0]  %s13, 256, %s679, [#allocation26], 64, 64, 4
        $region56: #{tpu_custom_call.1} parent=11 // pred_fallthru
          _
        // Predicated region
        $region57: #{tpu_custom_call.1} parent=11 // pred_check
          %p685 = pneg %p393
        $region58: #{tpu_custom_call.1} parent=11 // pred_check_branch
          %687 = sbr.rel (%p685) target = $region60
        $region59: #{tpu_custom_call.1} parent=11 // pred_region
          %s689 = ssub.s32 16, 16
          %690 = vsyncadd [#allocation26], %s689
          %s692 = sshll.u32 [#allocation27], 4
          %s693 = int_to_ptr.vmem [resolvable:$true] %s692
          %695 = dma.hbm_to_vmem [thread:$0]  %s14, 16, %s693, [#allocation26]
        $region60: #{tpu_custom_call.1} parent=11 // pred_fallthru
          _
        // Predicated region
        $region61: #{tpu_custom_call.1} parent=11 // pred_check
          %p696 = pneg %p414
        $region62: #{tpu_custom_call.1} parent=11 // pred_check_branch
          %698 = sbr.rel (%p696) target = $region64
        $region63: #{tpu_custom_call.1} parent=11 // pred_region
          %s700 = ssub.s32 512, 512
          %701 = vsyncadd [#allocation29], %s700
          %s702 = sshll.u32 [#allocation28], 4
          %s703 = int_to_ptr.vmem [resolvable:$true] %s702
          %708 = dma.hbm_to_vmem [thread:$0]  %s15, 512, %s703, [#allocation29], 64, 64, 4
        $region64: #{tpu_custom_call.1} parent=11 // pred_fallthru
          _
        // Predicated region
        $region65: #{tpu_custom_call.1} parent=11 // pred_check
          %p709 = pneg %p435
        $region66: #{tpu_custom_call.1} parent=11 // pred_check_branch
          %711 = sbr.rel (%p709) target = $region68
        $region67: #{tpu_custom_call.1} parent=11 // pred_region
          %s713 = ssub.s32 16, 16
          %714 = vsyncadd [#allocation29], %s713
          %s716 = sshll.u32 [#allocation30], 4
          %s717 = int_to_ptr.vmem [resolvable:$true] %s716
          %719 = dma.hbm_to_vmem [thread:$0]  %s16, 16, %s717, [#allocation29]
        $region68: #{tpu_custom_call.1} parent=11 // pred_fallthru
          _
        // Predicated region
        $region69: #{tpu_custom_call.1} parent=11 // pred_check
          %p720 = pneg %p456
        $region70: #{tpu_custom_call.1} parent=11 // pred_check_branch
          %722 = sbr.rel (%p720) target = $region72
        $region71: #{tpu_custom_call.1} parent=11 // pred_region
          %s724 = ssub.s32 16, 16
          %725 = vsyncadd [#allocation32], %s724
          %s727 = sshll.u32 [#allocation31], 4
          %s728 = int_to_ptr.vmem [resolvable:$true] %s727
          %730 = dma.hbm_to_vmem [thread:$0]  %s17, 16, %s728, [#allocation32]
        $region72: #{tpu_custom_call.1} parent=11 // pred_fallthru
          _
        // Predicated region
        $region73: #{tpu_custom_call.1} parent=11 // pred_check
          %p731 = pneg %p477
        $region74: #{tpu_custom_call.1} parent=11 // pred_check_branch
          %733 = sbr.rel (%p731) target = $region76
        $region75: #{tpu_custom_call.1} parent=11 // pred_region
          %s735 = ssub.s32 16, 16
          %736 = vsyncadd [#allocation32], %s735
          %s738 = sshll.u32 [#allocation33], 4
          %s739 = int_to_ptr.vmem [resolvable:$true] %s738
          %741 = dma.hbm_to_vmem [thread:$0]  %s18, 16, %s739, [#allocation32]
        $region76: #{tpu_custom_call.1} parent=11 // pred_fallthru
          _
      $region12: #{tpu_custom_call.1} parent=5 // pred_fallthru
        _
      %p742 = scmp.lt.s32.totalorder %s47, 2
      // Predicated region
      $region77: #{tpu_custom_call.1} parent=5 // pred_check
        %p743 = pneg %p742
      $region78: #{tpu_custom_call.1} parent=5 // pred_check_branch
        %745 = sbr.rel (%p743) target = $region80
      $region79: #{tpu_custom_call.1} parent=5 // pred_region
        // Predicated region
        $region81: #{tpu_custom_call.1} parent=79 // pred_check
          %p746 = pneg %p81
        $region82: #{tpu_custom_call.1} parent=79 // pred_check_branch
          %748 = sbr.rel (%p746) target = $region84
        $region83: #{tpu_custom_call.1} parent=79 // pred_region
          %s749 = sand.u32 %s71, 1
          %s750 = scalar_lea.sflag [#allocation5], %s749
          %s751 = sand.u32 %s71, 1
          %s752 = smul.addr %s751, 8
          %s753 = scalar_lea.vmem [#allocation4], %s752
          %s755 = ssub.s32 128, 128
          %756 = vsyncadd %s750, %s755
          %s757 = sadd.s32 %s55, %s54
          %s758 = smul.addr %s757, 128
          %s759 = scalar_lea.hbm %s0, %s758
          %s761 = sshll.u32 %s753, 4
          %s762 = int_to_ptr.vmem [resolvable:$true] %s761
          %764 = dma.hbm_to_vmem [thread:$0]  %s759, 128, %s762, %s750
        $region84: #{tpu_custom_call.1} parent=79 // pred_fallthru
          _
        // Predicated region
        $region85: #{tpu_custom_call.1} parent=79 // pred_check
          %p765 = pneg %p107
        $region86: #{tpu_custom_call.1} parent=79 // pred_check_branch
          %767 = sbr.rel (%p765) target = $region88
        $region87: #{tpu_custom_call.1} parent=79 // pred_region
          %s768 = sand.u32 %s47, 1
          %s769 = scalar_lea.sflag [#allocation8], %s768
          %s770 = sand.u32 %s97, 1
          %s771 = smul.addr %s770, 8
          %s772 = scalar_lea.vmem [#allocation7], %s771
          %s774 = ssub.s32 128, 128
          %775 = vsyncadd %s769, %s774
          %s776 = smul.addr %s54, 128
          %s777 = scalar_lea.hbm %s1, %s776
          %s779 = sshll.u32 %s772, 4
          %s780 = int_to_ptr.vmem [resolvable:$true] %s779
          %782 = dma.hbm_to_vmem [thread:$0]  %s777, 128, %s780, %s769
        $region88: #{tpu_custom_call.1} parent=79 // pred_fallthru
          _
        // Predicated region
        $region89: #{tpu_custom_call.1} parent=79 // pred_check
          %p783 = pneg %p135
        $region90: #{tpu_custom_call.1} parent=79 // pred_check_branch
          %785 = sbr.rel (%p783) target = $region92
        $region91: #{tpu_custom_call.1} parent=79 // pred_region
          %s786 = sand.u32 %s47, 1
          %s787 = scalar_lea.sflag [#allocation8], %s786
          %s788 = sand.u32 %s125, 1
          %s789 = smul.addr %s788, 4
          %s790 = scalar_lea.vmem [#allocation9], %s789
          %s792 = ssub.s32 64, 64
          %793 = vsyncadd %s787, %s792
          %s794 = sadd.s32 %s55, %s54
          %s795 = smul.addr %s794, 64
          %s796 = scalar_lea.hbm %s2, %s795
          %s798 = sshll.u32 %s790, 4
          %s799 = int_to_ptr.vmem [resolvable:$true] %s798
          %801 = dma.hbm_to_vmem [thread:$0]  %s796, 64, %s799, %s787
        $region92: #{tpu_custom_call.1} parent=79 // pred_fallthru
          _
      $region80: #{tpu_custom_call.1} parent=5 // pred_fallthru
        _
      %p802 = scmp.le.s32.totalorder 1, %s47
      %p803 = scmp.lt.s32.totalorder %s47, 3
      %p804 = pnand %p802, %p803
      %p805 = pneg %p804
      // Predicated region
      $region93: #{tpu_custom_call.1} parent=5 // pred_check
        _
      $region94: #{tpu_custom_call.1} parent=5 // pred_check_branch
        %807 = sbr.rel (%p804) target = $region96
      $region95: #{tpu_custom_call.1} parent=5 // pred_region
        %s808 = ssub.s32 %s47, 1
        %s809 = sand.u32 %s74, 1
        %s810 = scalar_lea.sflag [#allocation5], %s809
        %s811 = sand.u32 %s74, 1
        %s812 = smul.addr %s811, 8
        %s813 = scalar_lea.vmem [#allocation4], %s812
        // Predicated region
        $region97: #{tpu_custom_call.1} parent=95 // pred_check
          %p814 = pneg %p87
        $region98: #{tpu_custom_call.1} parent=95 // pred_check_branch
          %816 = sbr.rel (%p814) target = $region100
        $region99: #{tpu_custom_call.1} parent=95 // pred_region
          %817 = dma.done %s810, 128
        $region100: #{tpu_custom_call.1} parent=95 // pred_fallthru
          _
        %s818 = sand.u32 %s52, 1
        %s819 = scalar_lea.sflag [#allocation8], %s818
        %s820 = sand.u32 %s100, 1
        %s821 = smul.addr %s820, 8
        %s822 = scalar_lea.vmem [#allocation7], %s821
        // Predicated region
        $region101: #{tpu_custom_call.1} parent=95 // pred_check
          %p823 = pneg %p113
        $region102: #{tpu_custom_call.1} parent=95 // pred_check_branch
          %825 = sbr.rel (%p823) target = $region104
        $region103: #{tpu_custom_call.1} parent=95 // pred_region
          %826 = dma.done %s819, 128
        $region104: #{tpu_custom_call.1} parent=95 // pred_fallthru
          _
        %s827 = sand.u32 %s52, 1
        %s828 = scalar_lea.sflag [#allocation8], %s827
        %s829 = sand.u32 %s128, 1
        %s830 = smul.addr %s829, 4
        %s831 = scalar_lea.vmem [#allocation9], %s830
        // Predicated region
        $region105: #{tpu_custom_call.1} parent=95 // pred_check
          %p832 = pneg %p141
        $region106: #{tpu_custom_call.1} parent=95 // pred_check_branch
          %834 = sbr.rel (%p832) target = $region108
        $region107: #{tpu_custom_call.1} parent=95 // pred_region
          %835 = dma.done %s828, 64
        $region108: #{tpu_custom_call.1} parent=95 // pred_fallthru
          _
        // Predicated region
        $region109: #{tpu_custom_call.1} parent=95 // pred_check
          %p836 = pneg %p162
        $region110: #{tpu_custom_call.1} parent=95 // pred_check_branch
          %838 = sbr.rel (%p836) target = $region112
        $region111: #{tpu_custom_call.1} parent=95 // pred_region
          %839 = dma.done [#allocation11], 512
        $region112: #{tpu_custom_call.1} parent=95 // pred_fallthru
          _
        // Predicated region
        $region113: #{tpu_custom_call.1} parent=95 // pred_check
          %p840 = pneg %p183
        $region114: #{tpu_custom_call.1} parent=95 // pred_check_branch
          %842 = sbr.rel (%p840) target = $region116
        $region115: #{tpu_custom_call.1} parent=95 // pred_region
          %843 = dma.done [#allocation11], 32
        $region116: #{tpu_custom_call.1} parent=95 // pred_fallthru
          _
        // Predicated region
        $region117: #{tpu_custom_call.1} parent=95 // pred_check
          %p844 = pneg %p204
        $region118: #{tpu_custom_call.1} parent=95 // pred_check_branch
          %846 = sbr.rel (%p844) target = $region120
        $region119: #{tpu_custom_call.1} parent=95 // pred_region
          %847 = dma.done [#allocation14], 512
        $region120: #{tpu_custom_call.1} parent=95 // pred_fallthru
          _
        // Predicated region
        $region121: #{tpu_custom_call.1} parent=95 // pred_check
          %p848 = pneg %p225
        $region122: #{tpu_custom_call.1} parent=95 // pred_check_branch
          %850 = sbr.rel (%p848) target = $region124
        $region123: #{tpu_custom_call.1} parent=95 // pred_region
          %851 = dma.done [#allocation14], 32
        $region124: #{tpu_custom_call.1} parent=95 // pred_fallthru
          _
        // Predicated region
        $region125: #{tpu_custom_call.1} parent=95 // pred_check
          %p852 = pneg %p246
        $region126: #{tpu_custom_call.1} parent=95 // pred_check_branch
          %854 = sbr.rel (%p852) target = $region128
        $region127: #{tpu_custom_call.1} parent=95 // pred_region
          %855 = dma.done [#allocation17], 512
        $region128: #{tpu_custom_call.1} parent=95 // pred_fallthru
          _
        // Predicated region
        $region129: #{tpu_custom_call.1} parent=95 // pred_check
          %p856 = pneg %p267
        $region130: #{tpu_custom_call.1} parent=95 // pred_check_branch
          %858 = sbr.rel (%p856) target = $region132
        $region131: #{tpu_custom_call.1} parent=95 // pred_region
          %859 = dma.done [#allocation17], 32
        $region132: #{tpu_custom_call.1} parent=95 // pred_fallthru
          _
        // Predicated region
        $region133: #{tpu_custom_call.1} parent=95 // pred_check
          %p860 = pneg %p288
        $region134: #{tpu_custom_call.1} parent=95 // pred_check_branch
          %862 = sbr.rel (%p860) target = $region136
        $region135: #{tpu_custom_call.1} parent=95 // pred_region
          %863 = dma.done [#allocation20], 64
        $region136: #{tpu_custom_call.1} parent=95 // pred_fallthru
          _
        // Predicated region
        $region137: #{tpu_custom_call.1} parent=95 // pred_check
          %p864 = pneg %p309
        $region138: #{tpu_custom_call.1} parent=95 // pred_check_branch
          %866 = sbr.rel (%p864) target = $region140
        $region139: #{tpu_custom_call.1} parent=95 // pred_region
          %867 = dma.done [#allocation20], 16
        $region140: #{tpu_custom_call.1} parent=95 // pred_fallthru
          _
        // Predicated region
        $region141: #{tpu_custom_call.1} parent=95 // pred_check
          %p868 = pneg %p330
        $region142: #{tpu_custom_call.1} parent=95 // pred_check_branch
          %870 = sbr.rel (%p868) target = $region144
        $region143: #{tpu_custom_call.1} parent=95 // pred_region
          %871 = dma.done [#allocation23], 16
        $region144: #{tpu_custom_call.1} parent=95 // pred_fallthru
          _
        // Predicated region
        $region145: #{tpu_custom_call.1} parent=95 // pred_check
          %p872 = pneg %p351
        $region146: #{tpu_custom_call.1} parent=95 // pred_check_branch
          %874 = sbr.rel (%p872) target = $region148
        $region147: #{tpu_custom_call.1} parent=95 // pred_region
          %875 = dma.done [#allocation23], 16
        $region148: #{tpu_custom_call.1} parent=95 // pred_fallthru
          _
        // Predicated region
        $region149: #{tpu_custom_call.1} parent=95 // pred_check
          %p876 = pneg %p372
        $region150: #{tpu_custom_call.1} parent=95 // pred_check_branch
          %878 = sbr.rel (%p876) target = $region152
        $region151: #{tpu_custom_call.1} parent=95 // pred_region
          %879 = dma.done [#allocation26], 256
        $region152: #{tpu_custom_call.1} parent=95 // pred_fallthru
          _
        // Predicated region
        $region153: #{tpu_custom_call.1} parent=95 // pred_check
          %p880 = pneg %p393
        $region154: #{tpu_custom_call.1} parent=95 // pred_check_branch
          %882 = sbr.rel (%p880) target = $region156
        $region155: #{tpu_custom_call.1} parent=95 // pred_region
          %883 = dma.done [#allocation26], 16
        $region156: #{tpu_custom_call.1} parent=95 // pred_fallthru
          _
        // Predicated region
        $region157: #{tpu_custom_call.1} parent=95 // pred_check
          %p884 = pneg %p414
        $region158: #{tpu_custom_call.1} parent=95 // pred_check_branch
          %886 = sbr.rel (%p884) target = $region160
        $region159: #{tpu_custom_call.1} parent=95 // pred_region
          %887 = dma.done [#allocation29], 512
        $region160: #{tpu_custom_call.1} parent=95 // pred_fallthru
          _
        // Predicated region
        $region161: #{tpu_custom_call.1} parent=95 // pred_check
          %p888 = pneg %p435
        $region162: #{tpu_custom_call.1} parent=95 // pred_check_branch
          %890 = sbr.rel (%p888) target = $region164
        $region163: #{tpu_custom_call.1} parent=95 // pred_region
          %891 = dma.done [#allocation29], 16
        $region164: #{tpu_custom_call.1} parent=95 // pred_fallthru
          _
        // Predicated region
        $region165: #{tpu_custom_call.1} parent=95 // pred_check
          %p892 = pneg %p456
        $region166: #{tpu_custom_call.1} parent=95 // pred_check_branch
          %894 = sbr.rel (%p892) target = $region168
        $region167: #{tpu_custom_call.1} parent=95 // pred_region
          %895 = dma.done [#allocation32], 16
        $region168: #{tpu_custom_call.1} parent=95 // pred_fallthru
          _
        // Predicated region
        $region169: #{tpu_custom_call.1} parent=95 // pred_check
          %p896 = pneg %p477
        $region170: #{tpu_custom_call.1} parent=95 // pred_check_branch
          %898 = sbr.rel (%p896) target = $region172
        $region171: #{tpu_custom_call.1} parent=95 // pred_region
          %899 = dma.done [#allocation32], 16
        $region172: #{tpu_custom_call.1} parent=95 // pred_fallthru
          _
        %s900 = sand.u32 %s74, 1
        %s901 = scalar_lea.sflag [#allocation5], %s900
        %s902 = sand.u32 %s74, 1
        %s903 = smul.addr %s902, 8
        %s904 = scalar_lea.vmem [#allocation4], %s903
        %p905 = pneg %p87
        %p906 = pneg %p84
        %s907 = sand.u32 %s52, 1
        %s908 = scalar_lea.sflag [#allocation8], %s907
        %s909 = sand.u32 %s100, 1
        %s910 = smul.addr %s909, 8
        %s911 = scalar_lea.vmem [#allocation7], %s910
        %p912 = pneg %p113
        %p913 = pneg %p110
        %s914 = sand.u32 %s52, 1
        %s915 = scalar_lea.sflag [#allocation8], %s914
        %s916 = sand.u32 %s128, 1
        %s917 = smul.addr %s916, 4
        %s918 = scalar_lea.vmem [#allocation9], %s917
        %p919 = pneg %p141
        %p920 = pneg %p138
        %p921 = pneg %p162
        %p922 = pneg %p159
        %p923 = pneg %p183
        %p924 = pneg %p180
        %p925 = pneg %p204
        %p926 = pneg %p201
        %p927 = pneg %p225
        %p928 = pneg %p222
        %p929 = pneg %p246
        %p930 = pneg %p243
        %p931 = pneg %p267
        %p932 = pneg %p264
        %p933 = pneg %p288
        %p934 = pneg %p285
        %p935 = pneg %p309
        %p936 = pneg %p306
        %p937 = pneg %p330
        %p938 = pneg %p327
        %p939 = pneg %p351
        %p940 = pneg %p348
        %p941 = pneg %p372
        %p942 = pneg %p369
        %p943 = pneg %p393
        %p944 = pneg %p390
        %p945 = pneg %p414
        %p946 = pneg %p411
        %p947 = pneg %p435
        %p948 = pneg %p432
        %p949 = pneg %p456
        %p950 = pneg %p453
        %p951 = pneg %p477
        %p952 = pneg %p474
        %p953 = pneg %p505
        %p954 = pneg %p502
        %s955 = sand.u32 %s492, 1
        %s956 = scalar_lea.sflag [#allocation6], %s955
        %s957 = sand.u32 %s492, 1
        %s958 = smul.addr %s957, 8
        %s959 = scalar_lea.vmem [#allocation34], %s958
        %p960 = pneg %p533
        %p961 = pneg %p530
        %s962 = sand.u32 %s520, 1
        %s963 = scalar_lea.sflag [#allocation36], %s962
        %s964 = sand.u32 %s520, 1
        %s965 = smul.addr %s964, 16
        %s966 = scalar_lea.vmem [#allocation35], %s965
        %p970 = scmp.eq.s32.totalorder %s57, 0
        // Predicated region
        $region173: #{tpu_custom_call.1} parent=95 // pred_check
          %p971 = pneg %p970
        $region174: #{tpu_custom_call.1} parent=95 // pred_check_branch
          %973 = sbr.rel (%p971) target = $region176
        $region175: #{tpu_custom_call.1} parent=95 // pred_region
          %v974 = vld [vmem:[%s822] sm:$0xff]
          %v975 = vpack.c.bf16 %v974, %v974
          %v976 = vld [vmem:[#allocation13] sm:$0xf]
          %v977 = vld [vmem:[#allocation13 + $0x4] sm:$0xf]
          %v978 = vld [vmem:[#allocation13 + $0x8] sm:$0xf]
          %v979 = vld [vmem:[#allocation13 + $0xc] sm:$0xf]
          %v980 = vld [vmem:[#allocation15] sm:$0x1]
          %v982 = vlaneseq
          %v983 = vshrl.u32 %v982, 7
          %v984 = vsub.s32 0, %v983
          %v985 = vrot.slane %v980, %v984
          %v991 = vunpack.c.l.b16 %v976
          %v992 = vunpack.c.l.b16 %v977
          %v993 = vunpack.c.l.b16 %v978
          %v994 = vunpack.c.l.b16 %v979
          %v995 = vpack.c.b16 %v992, %v991
          %v996 = vpack.c.b16 %v994, %v993
          %vm999 = vcmask 261120
          %v1001 = vsel %vm999, %v975, 0
          %1003 = vmatprep.subr.bf16.mxu0 0
          %1004 = vmatpush1.bf16.msra.mxu0 %v995
          %1005 = vmatprep.subr.bf16.mxu0 0
          %1006 = vmatpush1.bf16.msra.mxu0 %v996
          %1007 = vmatprep.subr.bf16.mxu0 0
          %1008 = vmatpush1.bf16.msra.mxu0 0
          %1009 = vmatprep.subr.bf16.mxu0 0
          %1010 = vmatpush1.bf16.msra.mxu0 0
          %1011 = vmatprep.subr.bf16.mxu0 0
          %1012 = vmatpush1.bf16.msra.mxu0 0
          %1013 = vmatprep.subr.bf16.mxu0 0
          %1014 = vmatpush1.bf16.msra.mxu0 0
          %1015 = vmatprep.subr.bf16.mxu0 0
          %1016 = vmatpush1.bf16.msra.mxu0 0
          %1017 = vmatprep.subr.bf16.mxu0 0
          %1018 = vmatpush1.bf16.msra.mxu0 0
          %1019 = vmatprep.subr.bf16.mxu0 0
          %1020 = vmatpush1.bf16.msra.mxu0 0
          %1021 = vmatprep.subr.bf16.mxu0 0
          %1022 = vmatpush1.bf16.msra.mxu0 0
          %1023 = vmatprep.subr.bf16.mxu0 0
          %1024 = vmatpush1.bf16.msra.mxu0 0
          %1025 = vmatprep.subr.bf16.mxu0 0
          %1026 = vmatpush1.bf16.msra.mxu0 0
          %1027 = vmatprep.subr.bf16.mxu0 0
          %1028 = vmatpush1.bf16.msra.mxu0 0
          %1029 = vmatprep.subr.bf16.mxu0 0
          %1030 = vmatpush1.bf16.msra.mxu0 0
          %1031 = vmatprep.subr.bf16.mxu0 0
          %1032 = vmatpush1.bf16.msra.mxu0 0
          %1033 = vmatprep.subr.bf16.mxu0 0
          %1034 = vmatpush1.bf16.msra.mxu0 0
          %1035 = vmatprep.mubr.bf16.mxu0 0
          %1036 = vmatmul.mubr.bf16.gmra.mrb[0].mxu0 %v1001
          %v1037 = vpop.f32.mrb[0].mxu0
          %v1038 = vadd.f32 %v985, %v1037
          %v1039 = vpop.f32.mrb[0].mxu0
          %v1040 = vpop.f32.mrb[0].mxu0
          %v1041 = vpop.f32.mrb[0].mxu0
          %1042 = vdwg.mxu0
          %v1043 = vld [vmem:[#allocation16] sm:$0xf]
          %v1044 = vld [vmem:[#allocation16 + $0x4] sm:$0xf]
          %v1045 = vld [vmem:[#allocation16 + $0x8] sm:$0xf]
          %v1046 = vld [vmem:[#allocation16 + $0xc] sm:$0xf]
          %v1047 = vld [vmem:[#allocation18] sm:$0x1]
          %v1049 = vlaneseq
          %v1050 = vshrl.u32 %v1049, 7
          %v1051 = vsub.s32 0, %v1050
          %v1052 = vrot.slane %v1047, %v1051
          %v1058 = vunpack.c.l.b16 %v1043
          %v1059 = vunpack.c.l.b16 %v1044
          %v1060 = vunpack.c.l.b16 %v1045
          %v1061 = vunpack.c.l.b16 %v1046
          %v1062 = vpack.c.b16 %v1059, %v1058
          %v1063 = vpack.c.b16 %v1061, %v1060
          %1066 = vmatprep.subr.bf16.mxu0 0
          %1067 = vmatpush1.bf16.msra.mxu0 %v1062
          %1068 = vmatprep.subr.bf16.mxu0 0
          %1069 = vmatpush1.bf16.msra.mxu0 %v1063
          %1070 = vmatprep.subr.bf16.mxu0 0
          %1071 = vmatpush1.bf16.msra.mxu0 0
          %1072 = vmatprep.subr.bf16.mxu0 0
          %1073 = vmatpush1.bf16.msra.mxu0 0
          %1074 = vmatprep.subr.bf16.mxu0 0
          %1075 = vmatpush1.bf16.msra.mxu0 0
          %1076 = vmatprep.subr.bf16.mxu0 0
          %1077 = vmatpush1.bf16.msra.mxu0 0
          %1078 = vmatprep.subr.bf16.mxu0 0
          %1079 = vmatpush1.bf16.msra.mxu0 0
          %1080 = vmatprep.subr.bf16.mxu0 0
          %1081 = vmatpush1.bf16.msra.mxu0 0
          %1082 = vmatprep.subr.bf16.mxu0 0
          %1083 = vmatpush1.bf16.msra.mxu0 0
          %1084 = vmatprep.subr.bf16.mxu0 0
          %1085 = vmatpush1.bf16.msra.mxu0 0
          %1086 = vmatprep.subr.bf16.mxu0 0
          %1087 = vmatpush1.bf16.msra.mxu0 0
          %1088 = vmatprep.subr.bf16.mxu0 0
          %1089 = vmatpush1.bf16.msra.mxu0 0
          %1090 = vmatprep.subr.bf16.mxu0 0
          %1091 = vmatpush1.bf16.msra.mxu0 0
          %1092 = vmatprep.subr.bf16.mxu0 0
          %1093 = vmatpush1.bf16.msra.mxu0 0
          %1094 = vmatprep.subr.bf16.mxu0 0
          %1095 = vmatpush1.bf16.msra.mxu0 0
          %1096 = vmatprep.subr.bf16.mxu0 0
          %1097 = vmatpush1.bf16.msra.mxu0 0
          %1098 = vmatprep.mubr.bf16.mxu0 0
          %1099 = vmatmul.mubr.bf16.gmra.mrb[0].mxu0 %v1001
          %v1100 = vpop.f32.mrb[0].mxu0
          %v1101 = vadd.f32 %v1052, %v1100
          %v1102 = vpop.f32.mrb[0].mxu0
          %v1103 = vpop.f32.mrb[0].mxu0
          %v1104 = vpop.f32.mrb[0].mxu0
          %1105 = vdwg.mxu0
          %v1106 = vpack.c.bf16 %v1038, %v1038
          %vm1107 = vcmask 27648
          %1108 = vst.msk [vmem:[#allocation2] sm:$0xf] %vm1107, %v1106
          %v1109 = vpack.c.bf16 %v1101, %v1101
          %1110 = vst.msk [vmem:[#allocation3] sm:$0xf] %vm1107, %v1109
          %s1111 = scalar_lea.vmem [#allocation13], 16
          %v1112 = vld [vmem:[%s1111] sm:$0xf]
          %v1113 = vld [vmem:[%s1111 + $0x4] sm:$0xf]
          %v1114 = vld [vmem:[%s1111 + $0x8] sm:$0xf]
          %v1115 = vld [vmem:[%s1111 + $0xc] sm:$0xf]
          %s1116 = scalar_lea.vmem [#allocation15], 1
          %v1117 = vld [vmem:[%s1116] sm:$0x1]
          %v1119 = vlaneseq
          %v1120 = vshrl.u32 %v1119, 7
          %v1121 = vsub.s32 0, %v1120
          %v1122 = vrot.slane %v1117, %v1121
          %v1128 = vunpack.c.l.b16 %v1112
          %v1129 = vunpack.c.l.b16 %v1113
          %v1130 = vunpack.c.l.b16 %v1114
          %v1131 = vunpack.c.l.b16 %v1115
          %v1132 = vpack.c.b16 %v1129, %v1128
          %v1133 = vpack.c.b16 %v1131, %v1130
          %1136 = vmatprep.subr.bf16.mxu0 0
          %1137 = vmatpush1.bf16.msra.mxu0 %v1132
          %1138 = vmatprep.subr.bf16.mxu0 0
          %1139 = vmatpush1.bf16.msra.mxu0 %v1133
          %1140 = vmatprep.subr.bf16.mxu0 0
          %1141 = vmatpush1.bf16.msra.mxu0 0
          %1142 = vmatprep.subr.bf16.mxu0 0
          %1143 = vmatpush1.bf16.msra.mxu0 0
          %1144 = vmatprep.subr.bf16.mxu0 0
          %1145 = vmatpush1.bf16.msra.mxu0 0
          %1146 = vmatprep.subr.bf16.mxu0 0
          %1147 = vmatpush1.bf16.msra.mxu0 0
          %1148 = vmatprep.subr.bf16.mxu0 0
          %1149 = vmatpush1.bf16.msra.mxu0 0
          %1150 = vmatprep.subr.bf16.mxu0 0
          %1151 = vmatpush1.bf16.msra.mxu0 0
          %1152 = vmatprep.subr.bf16.mxu0 0
          %1153 = vmatpush1.bf16.msra.mxu0 0
          %1154 = vmatprep.subr.bf16.mxu0 0
          %1155 = vmatpush1.bf16.msra.mxu0 0
          %1156 = vmatprep.subr.bf16.mxu0 0
          %1157 = vmatpush1.bf16.msra.mxu0 0
          %1158 = vmatprep.subr.bf16.mxu0 0
          %1159 = vmatpush1.bf16.msra.mxu0 0
          %1160 = vmatprep.subr.bf16.mxu0 0
          %1161 = vmatpush1.bf16.msra.mxu0 0
          %1162 = vmatprep.subr.bf16.mxu0 0
          %1163 = vmatpush1.bf16.msra.mxu0 0
          %1164 = vmatprep.subr.bf16.mxu0 0
          %1165 = vmatpush1.bf16.msra.mxu0 0
          %1166 = vmatprep.subr.bf16.mxu0 0
          %1167 = vmatpush1.bf16.msra.mxu0 0
          %1168 = vmatprep.mubr.bf16.mxu0 0
          %1169 = vmatmul.mubr.bf16.gmra.mrb[0].mxu0 %v1001
          %v1170 = vpop.f32.mrb[0].mxu0
          %v1171 = vadd.f32 %v1122, %v1170
          %v1172 = vpop.f32.mrb[0].mxu0
          %v1173 = vpop.f32.mrb[0].mxu0
          %v1174 = vpop.f32.mrb[0].mxu0
          %1175 = vdwg.mxu0
          %s1176 = scalar_lea.vmem [#allocation16], 16
          %v1177 = vld [vmem:[%s1176] sm:$0xf]
          %v1178 = vld [vmem:[%s1176 + $0x4] sm:$0xf]
          %v1179 = vld [vmem:[%s1176 + $0x8] sm:$0xf]
          %v1180 = vld [vmem:[%s1176 + $0xc] sm:$0xf]
          %s1181 = scalar_lea.vmem [#allocation18], 1
          %v1182 = vld [vmem:[%s1181] sm:$0x1]
          %v1184 = vlaneseq
          %v1185 = vshrl.u32 %v1184, 7
          %v1186 = vsub.s32 0, %v1185
          %v1187 = vrot.slane %v1182, %v1186
          %v1193 = vunpack.c.l.b16 %v1177
          %v1194 = vunpack.c.l.b16 %v1178
          %v1195 = vunpack.c.l.b16 %v1179
          %v1196 = vunpack.c.l.b16 %v1180
          %v1197 = vpack.c.b16 %v1194, %v1193
          %v1198 = vpack.c.b16 %v1196, %v1195
          %1201 = vmatprep.subr.bf16.mxu0 0
          %1202 = vmatpush1.bf16.msra.mxu0 %v1197
          %1203 = vmatprep.subr.bf16.mxu0 0
          %1204 = vmatpush1.bf16.msra.mxu0 %v1198
          %1205 = vmatprep.subr.bf16.mxu0 0
          %1206 = vmatpush1.bf16.msra.mxu0 0
          %1207 = vmatprep.subr.bf16.mxu0 0
          %1208 = vmatpush1.bf16.msra.mxu0 0
          %1209 = vmatprep.subr.bf16.mxu0 0
          %1210 = vmatpush1.bf16.msra.mxu0 0
          %1211 = vmatprep.subr.bf16.mxu0 0
          %1212 = vmatpush1.bf16.msra.mxu0 0
          %1213 = vmatprep.subr.bf16.mxu0 0
          %1214 = vmatpush1.bf16.msra.mxu0 0
          %1215 = vmatprep.subr.bf16.mxu0 0
          %1216 = vmatpush1.bf16.msra.mxu0 0
          %1217 = vmatprep.subr.bf16.mxu0 0
          %1218 = vmatpush1.bf16.msra.mxu0 0
          %1219 = vmatprep.subr.bf16.mxu0 0
          %1220 = vmatpush1.bf16.msra.mxu0 0
          %1221 = vmatprep.subr.bf16.mxu0 0
          %1222 = vmatpush1.bf16.msra.mxu0 0
          %1223 = vmatprep.subr.bf16.mxu0 0
          %1224 = vmatpush1.bf16.msra.mxu0 0
          %1225 = vmatprep.subr.bf16.mxu0 0
          %1226 = vmatpush1.bf16.msra.mxu0 0
          %1227 = vmatprep.subr.bf16.mxu0 0
          %1228 = vmatpush1.bf16.msra.mxu0 0
          %1229 = vmatprep.subr.bf16.mxu0 0
          %1230 = vmatpush1.bf16.msra.mxu0 0
          %1231 = vmatprep.subr.bf16.mxu0 0
          %1232 = vmatpush1.bf16.msra.mxu0 0
          %1233 = vmatprep.mubr.bf16.mxu0 0
          %1234 = vmatmul.mubr.bf16.gmra.mrb[0].mxu0 %v1001
          %v1235 = vpop.f32.mrb[0].mxu0
          %v1236 = vadd.f32 %v1187, %v1235
          %v1237 = vpop.f32.mrb[0].mxu0
          %v1238 = vpop.f32.mrb[0].mxu0
          %v1239 = vpop.f32.mrb[0].mxu0
          %1240 = vdwg.mxu0
          %v1241 = vpack.c.bf16 %v1171, %v1171
          %s1242 = scalar_lea.vmem [#allocation2], 4
          %1243 = vst.msk [vmem:[%s1242] sm:$0xf] %vm1107, %v1241
          %v1244 = vpack.c.bf16 %v1236, %v1236
          %s1245 = scalar_lea.vmem [#allocation3], 4
          %1246 = vst.msk [vmem:[%s1245] sm:$0xf] %vm1107, %v1244
        $region176: #{tpu_custom_call.1} parent=95 // pred_fallthru
          _
        %v1247 = vld [vmem:[%s813] sm:$0xff]
        %v1248 = vpack.c.bf16 %v1247, %v1247
        %v1249 = vld [vmem:[%s831] sm:$0xf]
        %vm1250 = vcmp.gt.bf16.partialorder %v1249, 0
        %v1251 = vld [vmem:[#allocation10] sm:$0xf]
        %v1252 = vld [vmem:[#allocation10 + $0x4] sm:$0xf]
        %v1253 = vld [vmem:[#allocation10 + $0x8] sm:$0xf]
        %v1254 = vld [vmem:[#allocation10 + $0xc] sm:$0xf]
        %v1255 = vld [vmem:[#allocation12] sm:$0x1]
        %v1257 = vlaneseq
        %v1258 = vshrl.u32 %v1257, 7
        %v1259 = vsub.s32 0, %v1258
        %v1260 = vrot.slane %v1255, %v1259
        %v1266 = vunpack.c.l.b16 %v1251
        %v1267 = vunpack.c.l.b16 %v1252
        %v1268 = vunpack.c.l.b16 %v1253
        %v1269 = vunpack.c.l.b16 %v1254
        %v1270 = vpack.c.b16 %v1267, %v1266
        %v1271 = vpack.c.b16 %v1269, %v1268
        %vm1274 = vcmask 261120
        %v1276 = vsel %vm1274, %v1248, 0
        %1278 = vmatprep.subr.bf16.mxu0 0
        %1279 = vmatpush1.bf16.msra.mxu0 %v1270
        %1280 = vmatprep.subr.bf16.mxu0 0
        %1281 = vmatpush1.bf16.msra.mxu0 %v1271
        %1282 = vmatprep.subr.bf16.mxu0 0
        %1283 = vmatpush1.bf16.msra.mxu0 0
        %1284 = vmatprep.subr.bf16.mxu0 0
        %1285 = vmatpush1.bf16.msra.mxu0 0
        %1286 = vmatprep.subr.bf16.mxu0 0
        %1287 = vmatpush1.bf16.msra.mxu0 0
        %1288 = vmatprep.subr.bf16.mxu0 0
        %1289 = vmatpush1.bf16.msra.mxu0 0
        %1290 = vmatprep.subr.bf16.mxu0 0
        %1291 = vmatpush1.bf16.msra.mxu0 0
        %1292 = vmatprep.subr.bf16.mxu0 0
        %1293 = vmatpush1.bf16.msra.mxu0 0
        %1294 = vmatprep.subr.bf16.mxu0 0
        %1295 = vmatpush1.bf16.msra.mxu0 0
        %1296 = vmatprep.subr.bf16.mxu0 0
        %1297 = vmatpush1.bf16.msra.mxu0 0
        %1298 = vmatprep.subr.bf16.mxu0 0
        %1299 = vmatpush1.bf16.msra.mxu0 0
        %1300 = vmatprep.subr.bf16.mxu0 0
        %1301 = vmatpush1.bf16.msra.mxu0 0
        %1302 = vmatprep.subr.bf16.mxu0 0
        %1303 = vmatpush1.bf16.msra.mxu0 0
        %1304 = vmatprep.subr.bf16.mxu0 0
        %1305 = vmatpush1.bf16.msra.mxu0 0
        %1306 = vmatprep.subr.bf16.mxu0 0
        %1307 = vmatpush1.bf16.msra.mxu0 0
        %1308 = vmatprep.subr.bf16.mxu0 0
        %1309 = vmatpush1.bf16.msra.mxu0 0
        %1310 = vmatprep.mubr.bf16.mxu0 0
        %1311 = vmatmul.mubr.bf16.gmra.mrb[0].mxu0 %v1276
        %v1312 = vpop.f32.mrb[0].mxu0
        %v1313 = vadd.f32 %v1260, %v1312
        %v1314 = vpop.f32.mrb[0].mxu0
        %v1315 = vpop.f32.mrb[0].mxu0
        %v1316 = vpop.f32.mrb[0].mxu0
        %1317 = vdwg.mxu0
        %v1318 = vmul.f32 %v1313, 0.5
        %v1319 = vpack.c.bf16 %v1318, %v1318
        %v1320 = vld [vmem:[#allocation2] sm:$0xf]
        %vm1321 = vcmask 31744
        %v1323 = vsel %vm1321, %v1319, 0
        %v1326 = vsel %vm1321, %v1320, 0
        %1328 = vmatprep.subr.bf16.mxu0 0
        %1329 = vmatpush1.bf16.xpose.msra.mxu0 %v1326
        %1330 = vmatprep.subr.bf16.mxu0 0
        %1331 = vmatpush1.bf16.xpose.msra.mxu0 0
        %1332 = vmatprep.subr.bf16.mxu0 0
        %1333 = vmatpush1.bf16.xpose.msra.mxu0 0
        %1334 = vmatprep.subr.bf16.mxu0 0
        %1335 = vmatpush1.bf16.xpose.msra.mxu0 0
        %1336 = vmatprep.subr.bf16.mxu0 0
        %1337 = vmatpush1.bf16.xpose.msra.mxu0 0
        %1338 = vmatprep.subr.bf16.mxu0 0
        %1339 = vmatpush1.bf16.xpose.msra.mxu0 0
        %1340 = vmatprep.subr.bf16.mxu0 0
        %1341 = vmatpush1.bf16.xpose.msra.mxu0 0
        %1342 = vmatprep.subr.bf16.mxu0 0
        %1343 = vmatpush1.bf16.xpose.msra.mxu0 0
        %1344 = vmatprep.subr.bf16.mxu0 0
        %1345 = vmatpush1.bf16.xpose.msra.mxu0 0
        %1346 = vmatprep.subr.bf16.mxu0 0
        %1347 = vmatpush1.bf16.xpose.msra.mxu0 0
        %1348 = vmatprep.subr.bf16.mxu0 0
        %1349 = vmatpush1.bf16.xpose.msra.mxu0 0
        %1350 = vmatprep.subr.bf16.mxu0 0
        %1351 = vmatpush1.bf16.xpose.msra.mxu0 0
        %1352 = vmatprep.subr.bf16.mxu0 0
        %1353 = vmatpush1.bf16.xpose.msra.mxu0 0
        %1354 = vmatprep.subr.bf16.mxu0 0
        %1355 = vmatpush1.bf16.xpose.msra.mxu0 0
        %1356 = vmatprep.subr.bf16.mxu0 0
        %1357 = vmatpush1.bf16.xpose.msra.mxu0 0
        %1358 = vmatprep.subr.bf16.mxu0 0
        %1359 = vmatpush1.bf16.xpose.msra.mxu0 0
        %1360 = vmatprep.mubr.bf16.mxu0 0
        %1361 = vmatmul.mubr.bf16.gmra.mrb[0].mxu0 %v1323
        %v1362 = vpop.f32.mrb[0].mxu0
        %v1363 = vadd.f32 0.0, %v1362
        %v1364 = vpop.f32.mrb[0].mxu0
        %v1365 = vpop.f32.mrb[0].mxu0
        %v1366 = vpop.f32.mrb[0].mxu0
        %1367 = vdwg.mxu0
        %v1368 = vsel %vm1250, 65537, 0
        %v1369 = vunpack.c.l.b16 %v1368
        %vm1370 = vcmp.ne.s32.totalorder %v1369, 0
        %v1371 = vsel %vm1370, -1e+09, %v1363
        %vm1372 = vcmask 64512
        %v1373 = vsel %vm1372, %v1371, -inf
        %1374 = vmax.xlane.f32.xlu0 %v1373
        %v1375 = vpop.xlane.xlu0 %1374
        %v1376 = vsub.f32 %v1371, %v1375
        %v1377 = vmul.f32 %v1376, 1.442695
        %v1378 = vpow.pop %v1377
        %v1379 = vsel %vm1372, %v1378, 0.0
        %1380 = vadd.xlane.f32.xlu0 %v1379
        %v1381 = vpop.xlane.xlu0 %1380
        %v1382 = vrcp.pop %v1381
        %v1383 = vmul.f32 %v1378, %v1382
        %1384 = vst.msk [vmem:[%s966] sm:$0xff] %vm1372, %v1383
        %v1385 = vpack.c.bf16 %v1383, %v1383
        %v1386 = vld [vmem:[#allocation3] sm:$0xf]
        %v1388 = vsel %vm1372, %v1385, 0
        %vm1390 = vcmask 1043456
        %v1392 = vsel %vm1390, %v1386, 0
        %1394 = vmatprep.subr.bf16.mxu0 0
        %1395 = vmatpush1.bf16.msra.mxu0 %v1392
        %1396 = vmatprep.subr.bf16.mxu0 0
        %1397 = vmatpush1.bf16.msra.mxu0 0
        %1398 = vmatprep.subr.bf16.mxu0 0
        %1399 = vmatpush1.bf16.msra.mxu0 0
        %1400 = vmatprep.subr.bf16.mxu0 0
        %1401 = vmatpush1.bf16.msra.mxu0 0
        %1402 = vmatprep.subr.bf16.mxu0 0
        %1403 = vmatpush1.bf16.msra.mxu0 0
        %1404 = vmatprep.subr.bf16.mxu0 0
        %1405 = vmatpush1.bf16.msra.mxu0 0
        %1406 = vmatprep.subr.bf16.mxu0 0
        %1407 = vmatpush1.bf16.msra.mxu0 0
        %1408 = vmatprep.subr.bf16.mxu0 0
        %1409 = vmatpush1.bf16.msra.mxu0 0
        %1410 = vmatprep.subr.bf16.mxu0 0
        %1411 = vmatpush1.bf16.msra.mxu0 0
        %1412 = vmatprep.subr.bf16.mxu0 0
        %1413 = vmatpush1.bf16.msra.mxu0 0
        %1414 = vmatprep.subr.bf16.mxu0 0
        %1415 = vmatpush1.bf16.msra.mxu0 0
        %1416 = vmatprep.subr.bf16.mxu0 0
        %1417 = vmatpush1.bf16.msra.mxu0 0
        %1418 = vmatprep.subr.bf16.mxu0 0
        %1419 = vmatpush1.bf16.msra.mxu0 0
        %1420 = vmatprep.subr.bf16.mxu0 0
        %1421 = vmatpush1.bf16.msra.mxu0 0
        %1422 = vmatprep.subr.bf16.mxu0 0
        %1423 = vmatpush1.bf16.msra.mxu0 0
        %1424 = vmatprep.subr.bf16.mxu0 0
        %1425 = vmatpush1.bf16.msra.mxu0 0
        %1426 = vmatprep.mubr.bf16.mxu0 0
        %1427 = vmatmul.mubr.bf16.gmra.mrb[0].mxu0 %v1388
        %v1428 = vpop.f32.mrb[0].mxu0
        %v1429 = vadd.f32 0.0, %v1428
        %v1430 = vpop.f32.mrb[0].mxu0
        %v1431 = vpop.f32.mrb[0].mxu0
        %v1432 = vpop.f32.mrb[0].mxu0
        %1433 = vdwg.mxu0
        %v1434 = vpack.c.bf16 %v1429, %v1429
        %v1435 = vld [vmem:[#allocation19] sm:$0x3]
        %s1436 = scalar_lea.vmem [#allocation10], 16
        %v1437 = vld [vmem:[%s1436] sm:$0xf]
        %v1438 = vld [vmem:[%s1436 + $0x4] sm:$0xf]
        %v1439 = vld [vmem:[%s1436 + $0x8] sm:$0xf]
        %v1440 = vld [vmem:[%s1436 + $0xc] sm:$0xf]
        %s1441 = scalar_lea.vmem [#allocation12], 1
        %v1442 = vld [vmem:[%s1441] sm:$0x1]
        %v1444 = vlaneseq
        %v1445 = vshrl.u32 %v1444, 7
        %v1446 = vsub.s32 0, %v1445
        %v1447 = vrot.slane %v1442, %v1446
        %v1453 = vunpack.c.l.b16 %v1437
        %v1454 = vunpack.c.l.b16 %v1438
        %v1455 = vunpack.c.l.b16 %v1439
        %v1456 = vunpack.c.l.b16 %v1440
        %v1457 = vpack.c.b16 %v1454, %v1453
        %v1458 = vpack.c.b16 %v1456, %v1455
        %1461 = vmatprep.subr.bf16.mxu0 0
        %1462 = vmatpush1.bf16.msra.mxu0 %v1457
        %1463 = vmatprep.subr.bf16.mxu0 0
        %1464 = vmatpush1.bf16.msra.mxu0 %v1458
        %1465 = vmatprep.subr.bf16.mxu0 0
        %1466 = vmatpush1.bf16.msra.mxu0 0
        %1467 = vmatprep.subr.bf16.mxu0 0
        %1468 = vmatpush1.bf16.msra.mxu0 0
        %1469 = vmatprep.subr.bf16.mxu0 0
        %1470 = vmatpush1.bf16.msra.mxu0 0
        %1471 = vmatprep.subr.bf16.mxu0 0
        %1472 = vmatpush1.bf16.msra.mxu0 0
        %1473 = vmatprep.subr.bf16.mxu0 0
        %1474 = vmatpush1.bf16.msra.mxu0 0
        %1475 = vmatprep.subr.bf16.mxu0 0
        %1476 = vmatpush1.bf16.msra.mxu0 0
        %1477 = vmatprep.subr.bf16.mxu0 0
        %1478 = vmatpush1.bf16.msra.mxu0 0
        %1479 = vmatprep.subr.bf16.mxu0 0
        %1480 = vmatpush1.bf16.msra.mxu0 0
        %1481 = vmatprep.subr.bf16.mxu0 0
        %1482 = vmatpush1.bf16.msra.mxu0 0
        %1483 = vmatprep.subr.bf16.mxu0 0
        %1484 = vmatpush1.bf16.msra.mxu0 0
        %1485 = vmatprep.subr.bf16.mxu0 0
        %1486 = vmatpush1.bf16.msra.mxu0 0
        %1487 = vmatprep.subr.bf16.mxu0 0
        %1488 = vmatpush1.bf16.msra.mxu0 0
        %1489 = vmatprep.subr.bf16.mxu0 0
        %1490 = vmatpush1.bf16.msra.mxu0 0
        %1491 = vmatprep.subr.bf16.mxu0 0
        %1492 = vmatpush1.bf16.msra.mxu0 0
        %1493 = vmatprep.mubr.bf16.mxu0 0
        %1494 = vmatmul.mubr.bf16.gmra.mrb[0].mxu0 %v1276
        %v1495 = vpop.f32.mrb[0].mxu0
        %v1496 = vadd.f32 %v1447, %v1495
        %v1497 = vpop.f32.mrb[0].mxu0
        %v1498 = vpop.f32.mrb[0].mxu0
        %v1499 = vpop.f32.mrb[0].mxu0
        %1500 = vdwg.mxu0
        %v1501 = vmul.f32 %v1496, 0.5
        %v1502 = vpack.c.bf16 %v1501, %v1501
        %s1503 = scalar_lea.vmem [#allocation2], 4
        %v1504 = vld [vmem:[%s1503] sm:$0xf]
        %v1506 = vsel %vm1321, %v1502, 0
        %v1509 = vsel %vm1321, %v1504, 0
        %1511 = vmatprep.subr.bf16.mxu0 0
        %1512 = vmatpush1.bf16.xpose.msra.mxu0 %v1509
        %1513 = vmatprep.subr.bf16.mxu0 0
        %1514 = vmatpush1.bf16.xpose.msra.mxu0 0
        %1515 = vmatprep.subr.bf16.mxu0 0
        %1516 = vmatpush1.bf16.xpose.msra.mxu0 0
        %1517 = vmatprep.subr.bf16.mxu0 0
        %1518 = vmatpush1.bf16.xpose.msra.mxu0 0
        %1519 = vmatprep.subr.bf16.mxu0 0
        %1520 = vmatpush1.bf16.xpose.msra.mxu0 0
        %1521 = vmatprep.subr.bf16.mxu0 0
        %1522 = vmatpush1.bf16.xpose.msra.mxu0 0
        %1523 = vmatprep.subr.bf16.mxu0 0
        %1524 = vmatpush1.bf16.xpose.msra.mxu0 0
        %1525 = vmatprep.subr.bf16.mxu0 0
        %1526 = vmatpush1.bf16.xpose.msra.mxu0 0
        %1527 = vmatprep.subr.bf16.mxu0 0
        %1528 = vmatpush1.bf16.xpose.msra.mxu0 0
        %1529 = vmatprep.subr.bf16.mxu0 0
        %1530 = vmatpush1.bf16.xpose.msra.mxu0 0
        %1531 = vmatprep.subr.bf16.mxu0 0
        %1532 = vmatpush1.bf16.xpose.msra.mxu0 0
        %1533 = vmatprep.subr.bf16.mxu0 0
        %1534 = vmatpush1.bf16.xpose.msra.mxu0 0
        %1535 = vmatprep.subr.bf16.mxu0 0
        %1536 = vmatpush1.bf16.xpose.msra.mxu0 0
        %1537 = vmatprep.subr.bf16.mxu0 0
        %1538 = vmatpush1.bf16.xpose.msra.mxu0 0
        %1539 = vmatprep.subr.bf16.mxu0 0
        %1540 = vmatpush1.bf16.xpose.msra.mxu0 0
        %1541 = vmatprep.subr.bf16.mxu0 0
        %1542 = vmatpush1.bf16.xpose.msra.mxu0 0
        %1543 = vmatprep.mubr.bf16.mxu0 0
        %1544 = vmatmul.mubr.bf16.gmra.mrb[0].mxu0 %v1506
        %v1545 = vpop.f32.mrb[0].mxu0
        %v1546 = vadd.f32 0.0, %v1545
        %v1547 = vpop.f32.mrb[0].mxu0
        %v1548 = vpop.f32.mrb[0].mxu0
        %v1549 = vpop.f32.mrb[0].mxu0
        %1550 = vdwg.mxu0
        %v1551 = vsel %vm1370, -1e+09, %v1546
        %v1552 = vsel %vm1372, %v1551, -inf
        %1553 = vmax.xlane.f32.xlu0 %v1552
        %v1554 = vpop.xlane.xlu0 %1553
        %v1555 = vsub.f32 %v1551, %v1554
        %v1556 = vmul.f32 %v1555, 1.442695
        %v1557 = vpow.pop %v1556
        %v1558 = vsel %vm1372, %v1557, 0.0
        %1559 = vadd.xlane.f32.xlu0 %v1558
        %v1560 = vpop.xlane.xlu0 %1559
        %v1561 = vrcp.pop %v1560
        %v1562 = vmul.f32 %v1557, %v1561
        %s1563 = scalar_lea.vmem %s966, 8 [#allocation35]
        %1564 = vst.msk [vmem:[%s1563] sm:$0xff] %vm1372, %v1562
        %v1565 = vpack.c.bf16 %v1562, %v1562
        %s1566 = scalar_lea.vmem [#allocation3], 4
        %v1567 = vld [vmem:[%s1566] sm:$0xf]
        %v1569 = vsel %vm1372, %v1565, 0
        %v1572 = vsel %vm1390, %v1567, 0
        %1574 = vmatprep.subr.bf16.mxu0 0
        %1575 = vmatpush1.bf16.msra.mxu0 %v1572
        %1576 = vmatprep.subr.bf16.mxu0 0
        %1577 = vmatpush1.bf16.msra.mxu0 0
        %1578 = vmatprep.subr.bf16.mxu0 0
        %1579 = vmatpush1.bf16.msra.mxu0 0
        %1580 = vmatprep.subr.bf16.mxu0 0
        %1581 = vmatpush1.bf16.msra.mxu0 0
        %1582 = vmatprep.subr.bf16.mxu0 0
        %1583 = vmatpush1.bf16.msra.mxu0 0
        %1584 = vmatprep.subr.bf16.mxu0 0
        %1585 = vmatpush1.bf16.msra.mxu0 0
        %1586 = vmatprep.subr.bf16.mxu0 0
        %1587 = vmatpush1.bf16.msra.mxu0 0
        %1588 = vmatprep.subr.bf16.mxu0 0
        %1589 = vmatpush1.bf16.msra.mxu0 0
        %1590 = vmatprep.subr.bf16.mxu0 0
        %1591 = vmatpush1.bf16.msra.mxu0 0
        %1592 = vmatprep.subr.bf16.mxu0 0
        %1593 = vmatpush1.bf16.msra.mxu0 0
        %1594 = vmatprep.subr.bf16.mxu0 0
        %1595 = vmatpush1.bf16.msra.mxu0 0
        %1596 = vmatprep.subr.bf16.mxu0 0
        %1597 = vmatpush1.bf16.msra.mxu0 0
        %1598 = vmatprep.subr.bf16.mxu0 0
        %1599 = vmatpush1.bf16.msra.mxu0 0
        %1600 = vmatprep.subr.bf16.mxu0 0
        %1601 = vmatpush1.bf16.msra.mxu0 0
        %1602 = vmatprep.subr.bf16.mxu0 0
        %1603 = vmatpush1.bf16.msra.mxu0 0
        %1604 = vmatprep.subr.bf16.mxu0 0
        %1605 = vmatpush1.bf16.msra.mxu0 0
        %1606 = vmatprep.mubr.bf16.mxu0 0
        %1607 = vmatmul.mubr.bf16.gmra.mrb[0].mxu0 %v1569
        %v1608 = vpop.f32.mrb[0].mxu0
        %v1609 = vadd.f32 0.0, %v1608
        %v1610 = vpop.f32.mrb[0].mxu0
        %v1611 = vpop.f32.mrb[0].mxu0
        %v1612 = vpop.f32.mrb[0].mxu0
        %1613 = vdwg.mxu0
        %v1614 = vpack.c.bf16 %v1609, %v1609
        %s1615 = scalar_lea.vmem [#allocation19], 2
        %v1616 = vld [vmem:[%s1615] sm:$0x3]
        %v1618 = vsel %vm1321, %v1614, 0
        %vm1620 = vcmask 1041408
        %v1622 = vsel %vm1620, %v1616, 0
        %1624 = vmatprep.subr.bf16.mxu0 0
        %1625 = vmatpush1.bf16.msra.mxu0 %v1622
        %1626 = vmatprep.subr.bf16.mxu0 0
        %1627 = vmatpush1.bf16.msra.mxu0 0
        %1628 = vmatprep.subr.bf16.mxu0 0
        %1629 = vmatpush1.bf16.msra.mxu0 0
        %1630 = vmatprep.subr.bf16.mxu0 0
        %1631 = vmatpush1.bf16.msra.mxu0 0
        %1632 = vmatprep.subr.bf16.mxu0 0
        %1633 = vmatpush1.bf16.msra.mxu0 0
        %1634 = vmatprep.subr.bf16.mxu0 0
        %1635 = vmatpush1.bf16.msra.mxu0 0
        %1636 = vmatprep.subr.bf16.mxu0 0
        %1637 = vmatpush1.bf16.msra.mxu0 0
        %1638 = vmatprep.subr.bf16.mxu0 0
        %1639 = vmatpush1.bf16.msra.mxu0 0
        %1640 = vmatprep.subr.bf16.mxu0 0
        %1641 = vmatpush1.bf16.msra.mxu0 0
        %1642 = vmatprep.subr.bf16.mxu0 0
        %1643 = vmatpush1.bf16.msra.mxu0 0
        %1644 = vmatprep.subr.bf16.mxu0 0
        %1645 = vmatpush1.bf16.msra.mxu0 0
        %1646 = vmatprep.subr.bf16.mxu0 0
        %1647 = vmatpush1.bf16.msra.mxu0 0
        %1648 = vmatprep.subr.bf16.mxu0 0
        %1649 = vmatpush1.bf16.msra.mxu0 0
        %1650 = vmatprep.subr.bf16.mxu0 0
        %1651 = vmatpush1.bf16.msra.mxu0 0
        %1652 = vmatprep.subr.bf16.mxu0 0
        %1653 = vmatpush1.bf16.msra.mxu0 0
        %1654 = vmatprep.subr.bf16.mxu0 0
        %1655 = vmatpush1.bf16.msra.mxu0 0
        %1656 = vmatprep.mubr.bf16.mxu0 0
        %1657 = vmatmul.mubr.bf16.gmra.mrb[0].mxu0 %v1618
        %v1658 = vpop.f32.mrb[0].mxu0
        %v1659 = vadd.f32 0.0, %v1658
        %v1660 = vpop.f32.mrb[0].mxu0
        %v1661 = vpop.f32.mrb[0].mxu0
        %v1662 = vpop.f32.mrb[0].mxu0
        %1663 = vdwg.mxu0
        %v1665 = vsel %vm1321, %v1434, 0
        %v1668 = vsel %vm1620, %v1435, 0
        %1670 = vmatprep.subr.bf16.mxu0 0
        %1671 = vmatpush1.bf16.msra.mxu0 %v1668
        %1672 = vmatprep.subr.bf16.mxu0 0
        %1673 = vmatpush1.bf16.msra.mxu0 0
        %1674 = vmatprep.subr.bf16.mxu0 0
        %1675 = vmatpush1.bf16.msra.mxu0 0
        %1676 = vmatprep.subr.bf16.mxu0 0
        %1677 = vmatpush1.bf16.msra.mxu0 0
        %1678 = vmatprep.subr.bf16.mxu0 0
        %1679 = vmatpush1.bf16.msra.mxu0 0
        %1680 = vmatprep.subr.bf16.mxu0 0
        %1681 = vmatpush1.bf16.msra.mxu0 0
        %1682 = vmatprep.subr.bf16.mxu0 0
        %1683 = vmatpush1.bf16.msra.mxu0 0
        %1684 = vmatprep.subr.bf16.mxu0 0
        %1685 = vmatpush1.bf16.msra.mxu0 0
        %1686 = vmatprep.subr.bf16.mxu0 0
        %1687 = vmatpush1.bf16.msra.mxu0 0
        %1688 = vmatprep.subr.bf16.mxu0 0
        %1689 = vmatpush1.bf16.msra.mxu0 0
        %1690 = vmatprep.subr.bf16.mxu0 0
        %1691 = vmatpush1.bf16.msra.mxu0 0
        %1692 = vmatprep.subr.bf16.mxu0 0
        %1693 = vmatpush1.bf16.msra.mxu0 0
        %1694 = vmatprep.subr.bf16.mxu0 0
        %1695 = vmatpush1.bf16.msra.mxu0 0
        %1696 = vmatprep.subr.bf16.mxu0 0
        %1697 = vmatpush1.bf16.msra.mxu0 0
        %1698 = vmatprep.subr.bf16.mxu0 0
        %1699 = vmatpush1.bf16.msra.mxu0 0
        %1700 = vmatprep.subr.bf16.mxu0 0
        %1701 = vmatpush1.bf16.msra.mxu0 0
        %1702 = vmatprep.mubr.bf16.mxu0 0
        %1703 = vmatmul.mubr.bf16.gmra.mrb[0].mxu0 %v1665
        %v1704 = vpop.f32.mrb[0].mxu0
        %v1705 = vadd.f32 %v1659, %v1704
        %v1706 = vpop.f32.mrb[0].mxu0
        %v1707 = vpop.f32.mrb[0].mxu0
        %v1708 = vpop.f32.mrb[0].mxu0
        %1709 = vdwg.mxu0
        %v1710 = vld [vmem:[#allocation21] sm:$0x1]
        %v1712 = vlaneseq
        %v1713 = vshrl.u32 %v1712, 7
        %v1714 = vsub.s32 0, %v1713
        %v1715 = vrot.slane %v1710, %v1714
        %v1717 = vadd.f32 %v1705, %v1715
        %v1718 = vadd.f32 %v1247, %v1717
        %v1719 = vld [vmem:[#allocation22] sm:$0x1]
        %v1720 = vld [vmem:[#allocation24] sm:$0x1]
        %v1721 = vsel %vm1274, %v1718, 0.0
        %1722 = vadd.xlane.f32.xlu0 %v1721
        %v1723 = vpop.xlane.xlu0 %1722
        %v1724 = vrcp.pop 32.0
        %v1725 = vmul.f32 %v1723, %v1724
        %v1726 = vsub.f32 %v1718, %v1725
        %v1727 = vmul.f32 %v1726, %v1726
        %v1728 = vsel %vm1274, %v1727, 0.0
        %1729 = vadd.xlane.f32.xlu0 %v1728
        %v1730 = vpop.xlane.xlu0 %1729
        %v1731 = vmul.f32 %v1730, %v1724
        %v1732 = vadd.f32 %v1731, 1e-06
        %v1733 = vrsqrt.pop %v1732
        %v1734 = vmul.f32 %v1726, %v1733
        %v1736 = vlaneseq
        %v1737 = vshrl.u32 %v1736, 7
        %v1738 = vsub.s32 0, %v1737
        %v1739 = vrot.slane %v1719, %v1738
        %v1741 = vmul.f32 %v1734, %v1739
        %v1743 = vlaneseq
        %v1744 = vshrl.u32 %v1743, 7
        %v1745 = vsub.s32 0, %v1744
        %v1746 = vrot.slane %v1720, %v1745
        %v1748 = vadd.f32 %v1741, %v1746
        %v1749 = vpack.c.bf16 %v1748, %v1748
        %v1750 = vld [vmem:[#allocation25] sm:$0xf]
        %v1751 = vld [vmem:[#allocation25 + $0x4] sm:$0xf]
        %v1752 = vld [vmem:[#allocation25 + $0x8] sm:$0xf]
        %v1753 = vld [vmem:[#allocation25 + $0xc] sm:$0xf]
        %v1754 = vld [vmem:[#allocation27] sm:$0x1]
        %v1756 = vlaneseq
        %v1757 = vshrl.u32 %v1756, 7
        %v1758 = vsub.s32 0, %v1757
        %v1759 = vrot.slane %v1754, %v1758
        %v1765 = vunpack.c.l.b16 %v1750
        %v1766 = vunpack.c.l.b16 %v1751
        %v1767 = vunpack.c.l.b16 %v1752
        %v1768 = vunpack.c.l.b16 %v1753
        %v1769 = vpack.c.b16 %v1766, %v1765
        %v1770 = vpack.c.b16 %v1768, %v1767
        %v1774 = vsel %vm1274, %v1749, 0
        %1776 = vmatprep.subr.bf16.mxu0 0
        %1777 = vmatpush1.bf16.msra.mxu0 %v1769
        %1778 = vmatprep.subr.bf16.mxu0 0
        %1779 = vmatpush1.bf16.msra.mxu0 %v1770
        %1780 = vmatprep.subr.bf16.mxu0 0
        %1781 = vmatpush1.bf16.msra.mxu0 0
        %1782 = vmatprep.subr.bf16.mxu0 0
        %1783 = vmatpush1.bf16.msra.mxu0 0
        %1784 = vmatprep.subr.bf16.mxu0 0
        %1785 = vmatpush1.bf16.msra.mxu0 0
        %1786 = vmatprep.subr.bf16.mxu0 0
        %1787 = vmatpush1.bf16.msra.mxu0 0
        %1788 = vmatprep.subr.bf16.mxu0 0
        %1789 = vmatpush1.bf16.msra.mxu0 0
        %1790 = vmatprep.subr.bf16.mxu0 0
        %1791 = vmatpush1.bf16.msra.mxu0 0
        %1792 = vmatprep.subr.bf16.mxu0 0
        %1793 = vmatpush1.bf16.msra.mxu0 0
        %1794 = vmatprep.subr.bf16.mxu0 0
        %1795 = vmatpush1.bf16.msra.mxu0 0
        %1796 = vmatprep.subr.bf16.mxu0 0
        %1797 = vmatpush1.bf16.msra.mxu0 0
        %1798 = vmatprep.subr.bf16.mxu0 0
        %1799 = vmatpush1.bf16.msra.mxu0 0
        %1800 = vmatprep.subr.bf16.mxu0 0
        %1801 = vmatpush1.bf16.msra.mxu0 0
        %1802 = vmatprep.subr.bf16.mxu0 0
        %1803 = vmatpush1.bf16.msra.mxu0 0
        %1804 = vmatprep.subr.bf16.mxu0 0
        %1805 = vmatpush1.bf16.msra.mxu0 0
        %1806 = vmatprep.subr.bf16.mxu0 0
        %1807 = vmatpush1.bf16.msra.mxu0 0
        %1808 = vmatprep.mubr.bf16.mxu0 0
        %1809 = vmatmul.mubr.bf16.gmra.mrb[0].mxu0 %v1774
        %v1810 = vpop.f32.mrb[0].mxu0
        %v1811 = vadd.f32 %v1759, %v1810
        %v1812 = vpop.f32.mrb[0].mxu0
        %v1813 = vpop.f32.mrb[0].mxu0
        %v1814 = vpop.f32.mrb[0].mxu0
        %1815 = vdwg.mxu0
        %v1816 = vmax.f32 %v1811, 0.0
        %v1817 = vpack.c.bf16 %v1816, %v1816
        %v1818 = vld [vmem:[#allocation28] sm:$0xf]
        %v1819 = vld [vmem:[#allocation28 + $0x4] sm:$0xf]
        %v1820 = vld [vmem:[#allocation28 + $0x8] sm:$0xf]
        %v1821 = vld [vmem:[#allocation28 + $0xc] sm:$0xf]
        %v1822 = vld [vmem:[#allocation28 + $0x10] sm:$0xf]
        %v1823 = vld [vmem:[#allocation28 + $0x14] sm:$0xf]
        %v1824 = vld [vmem:[#allocation28 + $0x18] sm:$0xf]
        %v1825 = vld [vmem:[#allocation28 + $0x1c] sm:$0xf]
        %v1826 = vld [vmem:[#allocation30] sm:$0x1]
        %v1828 = vlaneseq
        %v1829 = vshrl.u32 %v1828, 7
        %v1830 = vsub.s32 0, %v1829
        %v1831 = vrot.slane %v1826, %v1830
        %v1841 = vunpack.c.l.b16 %v1818
        %v1842 = vunpack.c.l.b16 %v1819
        %v1843 = vunpack.c.l.b16 %v1820
        %v1844 = vunpack.c.l.b16 %v1821
        %v1845 = vunpack.c.l.b16 %v1822
        %v1846 = vunpack.c.l.b16 %v1823
        %v1847 = vunpack.c.l.b16 %v1824
        %v1848 = vunpack.c.l.b16 %v1825
        %v1849 = vpack.c.b16 %v1842, %v1841
        %v1850 = vpack.c.b16 %v1844, %v1843
        %v1851 = vpack.c.b16 %v1846, %v1845
        %v1852 = vpack.c.b16 %v1848, %v1847
        %vm1857 = vcmask 523264
        %v1859 = vsel %vm1857, %v1817, 0
        %1861 = vmatprep.subr.bf16.mxu0 0
        %1862 = vmatpush1.bf16.msra.mxu0 %v1849
        %1863 = vmatprep.subr.bf16.mxu0 0
        %1864 = vmatpush1.bf16.msra.mxu0 %v1850
        %1865 = vmatprep.subr.bf16.mxu0 0
        %1866 = vmatpush1.bf16.msra.mxu0 %v1851
        %1867 = vmatprep.subr.bf16.mxu0 0
        %1868 = vmatpush1.bf16.msra.mxu0 %v1852
        %1869 = vmatprep.subr.bf16.mxu0 0
        %1870 = vmatpush1.bf16.msra.mxu0 0
        %1871 = vmatprep.subr.bf16.mxu0 0
        %1872 = vmatpush1.bf16.msra.mxu0 0
        %1873 = vmatprep.subr.bf16.mxu0 0
        %1874 = vmatpush1.bf16.msra.mxu0 0
        %1875 = vmatprep.subr.bf16.mxu0 0
        %1876 = vmatpush1.bf16.msra.mxu0 0
        %1877 = vmatprep.subr.bf16.mxu0 0
        %1878 = vmatpush1.bf16.msra.mxu0 0
        %1879 = vmatprep.subr.bf16.mxu0 0
        %1880 = vmatpush1.bf16.msra.mxu0 0
        %1881 = vmatprep.subr.bf16.mxu0 0
        %1882 = vmatpush1.bf16.msra.mxu0 0
        %1883 = vmatprep.subr.bf16.mxu0 0
        %1884 = vmatpush1.bf16.msra.mxu0 0
        %1885 = vmatprep.subr.bf16.mxu0 0
        %1886 = vmatpush1.bf16.msra.mxu0 0
        %1887 = vmatprep.subr.bf16.mxu0 0
        %1888 = vmatpush1.bf16.msra.mxu0 0
        %1889 = vmatprep.subr.bf16.mxu0 0
        %1890 = vmatpush1.bf16.msra.mxu0 0
        %1891 = vmatprep.subr.bf16.mxu0 0
        %1892 = vmatpush1.bf16.msra.mxu0 0
        %1893 = vmatprep.mubr.bf16.mxu0 0
        %1894 = vmatmul.mubr.bf16.gmra.mrb[0].mxu0 %v1859
        %v1895 = vpop.f32.mrb[0].mxu0
        %v1896 = vadd.f32 %v1831, %v1895
        %v1897 = vpop.f32.mrb[0].mxu0
        %v1898 = vpop.f32.mrb[0].mxu0
        %v1899 = vpop.f32.mrb[0].mxu0
        %1900 = vdwg.mxu0
        %v1901 = vadd.f32 %v1748, %v1896
        %v1902 = vld [vmem:[#allocation31] sm:$0x1]
        %v1903 = vld [vmem:[#allocation33] sm:$0x1]
        %v1904 = vsel %vm1274, %v1901, 0.0
        %1905 = vadd.xlane.f32.xlu0 %v1904
        %v1906 = vpop.xlane.xlu0 %1905
        %v1907 = vmul.f32 %v1906, %v1724
        %v1908 = vsub.f32 %v1901, %v1907
        %v1909 = vmul.f32 %v1908, %v1908
        %v1910 = vsel %vm1274, %v1909, 0.0
        %1911 = vadd.xlane.f32.xlu0 %v1910
        %v1912 = vpop.xlane.xlu0 %1911
        %v1913 = vmul.f32 %v1912, %v1724
        %v1914 = vadd.f32 %v1913, 1e-06
        %v1915 = vrsqrt.pop %v1914
        %v1916 = vmul.f32 %v1908, %v1915
        %v1918 = vlaneseq
        %v1919 = vshrl.u32 %v1918, 7
        %v1920 = vsub.s32 0, %v1919
        %v1921 = vrot.slane %v1902, %v1920
        %v1923 = vmul.f32 %v1916, %v1921
        %v1925 = vlaneseq
        %v1926 = vshrl.u32 %v1925, 7
        %v1927 = vsub.s32 0, %v1926
        %v1928 = vrot.slane %v1903, %v1927
        %v1930 = vadd.f32 %v1923, %v1928
        %1931 = vst.msk [vmem:[%s959] sm:$0xff] %vm1274, %v1930
        %s1932 = sand.u32 %s492, 1
        %s1933 = scalar_lea.sflag [#allocation6], %s1932
        %s1934 = sand.u32 %s492, 1
        %s1935 = smul.addr %s1934, 8
        %s1936 = scalar_lea.vmem [#allocation34], %s1935
        %s1937 = sand.u32 %s520, 1
        %s1938 = scalar_lea.sflag [#allocation36], %s1937
        %s1939 = sand.u32 %s520, 1
        %s1940 = smul.addr %s1939, 16
        %s1941 = scalar_lea.vmem [#allocation35], %s1940
        // Predicated region
        $region177: #{tpu_custom_call.1} parent=95 // pred_check
          %p1942 = pneg %p502
        $region178: #{tpu_custom_call.1} parent=95 // pred_check_branch
          %1944 = sbr.rel (%p1942) target = $region180
        $region179: #{tpu_custom_call.1} parent=95 // pred_region
          %s1946 = ssub.s32 128, 128
          %1947 = vsyncadd %s1933, %s1946
          %s1948 = sadd.s32 %s57, %s56
          %s1949 = smul.addr %s1948, 128
          %s1950 = scalar_lea.hbm %s19, %s1949
          %s1952 = sshll.u32 %s1936, 4
          %s1953 = int_to_ptr.vmem [resolvable:$true] %s1952
          %1955 = dma.vmem_to_hbm [thread:$0]  %s1953, 128, %s1950, %s1933
        $region180: #{tpu_custom_call.1} parent=95 // pred_fallthru
          _
        // Predicated region
        $region181: #{tpu_custom_call.1} parent=95 // pred_check
          %p1956 = pneg %p530
        $region182: #{tpu_custom_call.1} parent=95 // pred_check_branch
          %1958 = sbr.rel (%p1956) target = $region184
        $region183: #{tpu_custom_call.1} parent=95 // pred_region
          %s1960 = ssub.s32 256, 256
          %1961 = vsyncadd %s1938, %s1960
          %s1962 = smul.addr %s56, 2
          %s1963 = sadd.s32 %s57, %s1962
          %s1964 = smul.addr %s1963, 128
          %s1965 = scalar_lea.hbm %s20, %s1964
          %s1966 = sshll.u32 %s1941, 4
          %s1967 = int_to_ptr.vmem [resolvable:$true] %s1966
          %1972 = dma.vmem_to_hbm [thread:$0]  %s1967, 256, %s1965, %s1938, 128, 128, 8
        $region184: #{tpu_custom_call.1} parent=95 // pred_fallthru
          _
      $region96: #{tpu_custom_call.1} parent=5 // pred_fallthru
        _
      %p1973 = scmp.le.s32.totalorder 2, %s47
      // Predicated region
      $region185: #{tpu_custom_call.1} parent=5 // pred_check
        %p1974 = pneg %p1973
      $region186: #{tpu_custom_call.1} parent=5 // pred_check_branch
        %1976 = sbr.rel (%p1974) target = $region188
      $region187: #{tpu_custom_call.1} parent=5 // pred_region
        %s1977 = ssub.s32 %s47, 2
        // Predicated region
        $region189: #{tpu_custom_call.1} parent=187 // pred_check
          %p1978 = pneg %p508
        $region190: #{tpu_custom_call.1} parent=187 // pred_check_branch
          %1980 = sbr.rel (%p1978) target = $region192
        $region191: #{tpu_custom_call.1} parent=187 // pred_region
          %s1981 = sand.u32 %s493, 1
          %s1982 = scalar_lea.sflag [#allocation6], %s1981
          %s1983 = sand.u32 %s493, 1
          %s1984 = smul.addr %s1983, 8
          %s1985 = scalar_lea.vmem [#allocation34], %s1984
          %1986 = dma.done %s1982, 128
        $region192: #{tpu_custom_call.1} parent=187 // pred_fallthru
          _
        // Predicated region
        $region193: #{tpu_custom_call.1} parent=187 // pred_check
          %p1987 = pneg %p536
        $region194: #{tpu_custom_call.1} parent=187 // pred_check_branch
          %1989 = sbr.rel (%p1987) target = $region196
        $region195: #{tpu_custom_call.1} parent=187 // pred_region
          %s1990 = sand.u32 %s521, 1
          %s1991 = scalar_lea.sflag [#allocation36], %s1990
          %s1992 = sand.u32 %s521, 1
          %s1993 = smul.addr %s1992, 16
          %s1994 = scalar_lea.vmem [#allocation35], %s1993
          %1995 = dma.done %s1991, 256
        $region196: #{tpu_custom_call.1} parent=187 // pred_fallthru
          _
      $region188: #{tpu_custom_call.1} parent=5 // pred_fallthru
        _
    $region6: #{tpu_custom_call.1} parent=1 // loop_footer
      %s51 = sadd.s32 1, %s47
    $region7: #{tpu_custom_call.1} parent=1 // loop_footer_branch
      %46 = sbr.rel target = $region3
    $region8: #{tpu_custom_call.1} parent=1 // loop_exit
      _
    %1996 = vsyncpa [#allocation5], 1
    %s1997 = scalar_lea.sflag [#allocation5], 1
    %1998 = vsyncpa %s1997, 1
    %1999 = vsyncpa [#allocation8], 1
    %s2000 = scalar_lea.sflag [#allocation8], 1
    %2001 = vsyncpa %s2000, 1
    %2002 = vsyncpa [#allocation11], 1
    %2003 = vsyncpa [#allocation14], 1
    %2004 = vsyncpa [#allocation17], 1
    %2005 = vsyncpa [#allocation20], 1
    %2006 = vsyncpa [#allocation23], 1
    %2007 = vsyncpa [#allocation26], 1
    %2008 = vsyncpa [#allocation29], 1
    %2009 = vsyncpa [#allocation32], 1
    %2010 = vsyncpa [#allocation6], 1
    %s2011 = scalar_lea.sflag [#allocation6], 1
    %2012 = vsyncpa %s2011, 1
    %2013 = vsyncpa [#allocation36], 1
    %s2014 = scalar_lea.sflag [#allocation36], 1
    %2015 = vsyncpa %s2014, 1

</llo_original>
